<compile_context>
chip_gen: v6e
topology: v6e:2x2x1
jax: 0.10.0
libtpu: 0.0.40
codegen_flags: <defaults>
</compile_context>

<pallas_src>
import functools
import math

import jax
import jax.numpy as jnp
from jax import lax
from jax.experimental import pallas as pl
from jax.experimental.pallas import tpu as pltpu


def _dwconv_kernel(x_ref, w_ref, b_ref, col_ref, o_ref, xp_ref, *, width, strip_rows):
    # x_ref/o_ref: (1, N, C)  token-major image (C on lanes, tokens on sublanes)
    # w_ref:       (9, C)     depthwise taps, k = 3*dh + dw
    # b_ref:       (1, C)     bias
    # col_ref:     (TS, 1)    int32, strip-local column index (token % W)
    # xp_ref:      (N + 2W, C) scratch in the input dtype:
    #              [W-row zero halo | image | W-row zero halo]
    _, N, C = o_ref.shape
    W = width
    H = N // W
    TH = strip_rows
    TS = TH * W                       # tokens per strip
    n_strips = -(-H // TH)            # static

    # ---- Stage the image into the H-padded scratch (input dtype). ----
    # Zero ONLY the 2*W halo rows; the interior is fully overwritten below.
    zero_rows = jnp.zeros((W, C), dtype=xp_ref.dtype)
    xp_ref[pl.ds(0, W), :] = zero_rows
    xp_ref[pl.ds(N + W, W), :] = zero_rows
    xp_ref[pl.ds(W, N), :] = x_ref[0]

    # ---- Hoisted per-invocation constants. ----
    w_all = w_ref[...].astype(jnp.float32)             # (9, C)
    taps = [w_all[k:k + 1] for k in range(9)]          # each (1, C)
    bias_full = jnp.broadcast_to(b_ref[...].astype(jnp.float32), (TS, C))
    col = col_ref[...]                                  # (TS, 1) int32
    not_first_col = col != 0                            # dw == 0 tap (left neighbour)
    not_last_col = col != (W - 1)                       # dw == 2 tap (right neighbour)

    def strip_body(s):
        t0 = s * TS                                     # first output token of strip
        if isinstance(s, int):
            t0 = min(t0, N - TS)                        # clamp last (ragged) strip
        else:
            t0 = pl.multiple_of(jnp.minimum(t0, N - TS), W)
        acc = bias_full
        for dh in range(3):
            # Output token (y, x) of the strip needs input row y + dh - 1, which
            # in padded-scratch coordinates is token t0 + dh*W + i (aligned load).
            rows = xp_ref[pl.ds(t0 + dh * W, TS), :].astype(jnp.float32)   # (TS, C)
            acc = acc + rows * taps[3 * dh + 1]                            # dw == 1
            left = pltpu.roll(rows, shift=1, axis=0)                       # x[.., j-1]
            acc = acc + jnp.where(not_first_col, left, 0.0) * taps[3 * dh]
            right = pltpu.roll(rows, shift=TS - 1, axis=0)                 # x[.., j+1]
            acc = acc + jnp.where(not_last_col, right, 0.0) * taps[3 * dh + 2]
        o_ref[0, pl.ds(t0, TS), :] = acc.astype(o_ref.dtype)

    if n_strips <= 8:                 # short loop: fully unrolled (static offsets)
        for s in range(n_strips):
            strip_body(s)
    else:                             # long loop: bound code size / live ranges
        pl.loop(0, n_strips)(strip_body)


def dwconv_forward(x, w, b, H, W, *, strip_rows=None):
    """Depthwise 3x3 conv (stride 1, pad 1, bias) on token layout.

    x: (B, N, C) with N == H*W,  w: (9, C),  b: (1, C)  ->  (B, N, C)
    """
    B, N, C = x.shape
    assert N == H * W, "N must equal H*W"

    # Lane-pad channels only when C is ragged (no-op when C % 128 == 0).
    # TODO(synk): handle ragged C in-kernel with a masked store on the tail
    # channel block to avoid this extra HBM pad/slice pass.
    c_pad = -(-C // 128) * 128
    if c_pad != C:
        x = jnp.pad(x, ((0, 0), (0, 0), (0, c_pad - C)))
        w = jnp.pad(w, ((0, 0), (0, c_pad - C)))
        b = jnp.pad(b, ((0, 0), (0, c_pad - C)))

    # Strip height: keep the per-strip f32 accumulator around <= 64 KiB
    # (~16 vregs) so the 9-tap FMA chain stays register-resident.
    if strip_rows is None:
        strip_rows = max(1, (64 * 1024) // (W * c_pad * 4))
    strip_rows = max(1, min(strip_rows, H))
    TS = strip_rows * W

    col_ids = (jnp.arange(TS, dtype=jnp.int32) % W).reshape(TS, 1)

    # VMEM budget: double-buffered in/out image blocks, the staging scratch and
    # the per-strip f32 temporaries (window + acc + rolled/masked copies).
    itemsize = jnp.dtype(x.dtype).itemsize
    img_bytes = N * c_pad * itemsize
    scratch_bytes = (N + 2 * W) * c_pad * itemsize
    strip_bytes = 4 * TS * c_pad * 4
    vmem_need = 4 * img_bytes + scratch_bytes + strip_bytes + 64 * c_pad + (1 << 20)

    cparams = dict(dimension_semantics=("parallel",))
    if vmem_need > 32 * 1024 * 1024:
        try:
            vmem_phys = int(pltpu.get_tpu_info().vmem_capacity_bytes)
        except Exception:
            vmem_phys = 64 * 1024 * 1024   # v7x has the smallest per-core VMEM
        cparams["vmem_limit_bytes"] = int(min(vmem_need, int(0.85 * vmem_phys)))
        # TODO(synk): if vmem_need still exceeds this clamp (huge H*W*C), tile H
        # with a second grid axis instead of raising the limit further.

    kernel = functools.partial(_dwconv_kernel, width=W, strip_rows=strip_rows)

    out = pl.pallas_call(
        kernel,
        out_shape=jax.ShapeDtypeStruct((B, N, c_pad), x.dtype),
        grid_spec=pltpu.PrefetchScalarGridSpec(
            num_scalar_prefetch=0,
            grid=(B,),
            in_specs=[
                pl.BlockSpec((1, N, c_pad), lambda bi: (bi, 0, 0)),   # x (one image)
                pl.BlockSpec((9, c_pad), lambda bi: (0, 0)),          # taps (resident)
                pl.BlockSpec((1, c_pad), lambda bi: (0, 0)),          # bias (resident)
                pl.BlockSpec((TS, 1), lambda bi: (0, 0)),             # column ids
            ],
            out_specs=pl.BlockSpec((1, N, c_pad), lambda bi: (bi, 0, 0)),
            scratch_shapes=[pltpu.VMEM((N + 2 * W, c_pad), x.dtype)],
        ),
        compiler_params=pltpu.CompilerParams(**cparams),
    )(x, w, b, col_ids)

    if c_pad != C:
        out = out[..., :C]
    return out


def init_dwconv_params(key, dim, dtype=jnp.float32):
    """Mimic torch Conv2d(dim, dim, 3, groups=dim) default init: U(-1/3, 1/3)."""
    kw, kb = jax.random.split(key)
    bound = 1.0 / math.sqrt(1 * 3 * 3)  # fan_in per group = 1*3*3
    w = jax.random.uniform(kw, (9, dim), minval=-bound, maxval=bound, dtype=dtype)
    b = jax.random.uniform(kb, (1, dim), minval=-bound, maxval=bound, dtype=dtype)
    return w, b


if __name__ == "__main__":
    key = jax.random.PRNGKey(0)
    kx, kp = jax.random.split(key)

    # Small shapes consistent with the module: tokens (B, N=H*W, C).
    B, H, W, C = 2, 16, 16, 128
    N = H * W

    x = jax.random.normal(kx, (B, N, C), dtype=jnp.float32)
    w, b = init_dwconv_params(kp, C)

    y = dwconv_forward(x, w, b, H, W)
    y = jax.block_until_ready(y)

    # Pure-JAX reference: depthwise conv via lax.conv_general_dilated.
    xi = x.reshape(B, H, W, C)
    k_hwio = w.reshape(3, 3, 1, C)  # k[dh, dw, 0, c] == w[3*dh + dw, c]
    y_ref = lax.conv_general_dilated(
        xi, k_hwio, window_strides=(1, 1), padding="SAME",
        dimension_numbers=("NHWC", "HWIO", "NHWC"),
        feature_group_count=C, precision=lax.Precision.HIGHEST)
    y_ref = (y_ref + b[0]).reshape(B, N, C)

    assert y.shape == (B, N, C), y.shape
    err = float(jnp.max(jnp.abs(y - y_ref)))
    assert jnp.allclose(y, y_ref, atol=1e-4, rtol=1e-4), f"mismatch vs reference: {err}"

    print("KERNEL_OK")
</pallas_src>

<mosaic_0001>
module attributes {stable_mosaic.version = 11 : i64} {
  func.func @_dwconv_kernel(%arg0: i32, %arg1: memref<1x256x128xf32, #tpu.memory_space<vmem>>, %arg2: memref<9x128xf32, #tpu.memory_space<vmem>>, %arg3: memref<1x128xf32, #tpu.memory_space<vmem>>, %arg4: memref<128x1xi32, #tpu.memory_space<vmem>>, %arg5: memref<1x256x128xf32, #tpu.memory_space<vmem>>, %arg6: memref<288x128xf32, #tpu.memory_space<vmem>>) attributes {dimension_semantics = [#tpu.dimension_semantics<parallel>], iteration_bounds = array<i64: 2>, scalar_prefetch = 0 : i64, scratch_operands = 1 : i64, tpu.core_type = #tpu.core_type<tc>, window_params = [{transform_indices = @transform_0, window_bounds = array<i64: 1, 256, 128>}, {pipeline_mode = #tpu.pipeline_mode<synchronous>, transform_indices = @transform_1, window_bounds = array<i64: 9, 128>}, {pipeline_mode = #tpu.pipeline_mode<synchronous>, transform_indices = @transform_2, window_bounds = array<i64: 1, 128>}, {pipeline_mode = #tpu.pipeline_mode<synchronous>, transform_indices = @transform_3, window_bounds = array<i64: 128, 1>}, {transform_indices = @transform_4, window_bounds = array<i64: 1, 256, 128>}]} {
    %cst = arith.constant 0.000000e+00 : f32
    %0 = vector.broadcast %cst : f32 to vector<16x128xf32>
    %c0 = arith.constant 0 : index
    %c0_0 = arith.constant 0 : index
    %1 = vector.load %arg6[%c0, %c0_0] : memref<288x128xf32, #tpu.memory_space<vmem>>, vector<16x128xf32>
    tpu.vector_store %arg6[%c0, %c0_0], %0 {strides = array<i32>} : memref<288x128xf32, #tpu.memory_space<vmem>>, vector<16x128xf32>,
    %c272 = arith.constant 272 : index
    %c0_1 = arith.constant 0 : index
    %2 = vector.load %arg6[%c272, %c0_1] : memref<288x128xf32, #tpu.memory_space<vmem>>, vector<16x128xf32>
    tpu.vector_store %arg6[%c272, %c0_1], %0 {strides = array<i32>} : memref<288x128xf32, #tpu.memory_space<vmem>>, vector<16x128xf32>,
    %c0_2 = arith.constant 0 : index
    %c0_3 = arith.constant 0 : index
    %c0_4 = arith.constant 0 : index
    %3 = vector.load %arg1[%c0_2, %c0_3, %c0_4] : memref<1x256x128xf32, #tpu.memory_space<vmem>>, vector<1x256x128xf32>
    %4 = vector.shape_cast %3 : vector<1x256x128xf32> to vector<256x128xf32>
    %c16 = arith.constant 16 : index
    %c0_5 = arith.constant 0 : index
    %5 = vector.load %arg6[%c16, %c0_5] : memref<288x128xf32, #tpu.memory_space<vmem>>, vector<256x128xf32>
    tpu.vector_store %arg6[%c16, %c0_5], %4 {strides = array<i32>} : memref<288x128xf32, #tpu.memory_space<vmem>>, vector<256x128xf32>,
    %c0_6 = arith.constant 0 : index
    %c0_7 = arith.constant 0 : index
    %6 = vector.load %arg2[%c0_6, %c0_7] : memref<9x128xf32, #tpu.memory_space<vmem>>, vector<9x128xf32>
    %7 = vector.extract_strided_slice %6 {offsets = [0, 0], sizes = [1, 128], strides = [1, 1]} : vector<9x128xf32> to vector<1x128xf32>
    %8 = vector.extract_strided_slice %6 {offsets = [1, 0], sizes = [1, 128], strides = [1, 1]} : vector<9x128xf32> to vector<1x128xf32>
    %9 = vector.extract_strided_slice %6 {offsets = [2, 0], sizes = [1, 128], strides = [1, 1]} : vector<9x128xf32> to vector<1x128xf32>
    %10 = vector.extract_strided_slice %6 {offsets = [3, 0], sizes = [1, 128], strides = [1, 1]} : vector<9x128xf32> to vector<1x128xf32>
    %11 = vector.extract_strided_slice %6 {offsets = [4, 0], sizes = [1, 128], strides = [1, 1]} : vector<9x128xf32> to vector<1x128xf32>
    %12 = vector.extract_strided_slice %6 {offsets = [5, 0], sizes = [1, 128], strides = [1, 1]} : vector<9x128xf32> to vector<1x128xf32>
    %13 = vector.extract_strided_slice %6 {offsets = [6, 0], sizes = [1, 128], strides = [1, 1]} : vector<9x128xf32> to vector<1x128xf32>
    %14 = vector.extract_strided_slice %6 {offsets = [7, 0], sizes = [1, 128], strides = [1, 1]} : vector<9x128xf32> to vector<1x128xf32>
    %15 = vector.extract_strided_slice %6 {offsets = [8, 0], sizes = [1, 128], strides = [1, 1]} : vector<9x128xf32> to vector<1x128xf32>
    %c0_8 = arith.constant 0 : index
    %c0_9 = arith.constant 0 : index
    %16 = vector.load %arg3[%c0_8, %c0_9] : memref<1x128xf32, #tpu.memory_space<vmem>>, vector<1x128xf32>
    %17 = vector.shape_cast %16 : vector<1x128xf32> to vector<1x128xf32>
    %18 = vector.broadcast %17 : vector<1x128xf32> to vector<128x128xf32>
    %c0_10 = arith.constant 0 : index
    %c0_11 = arith.constant 0 : index
    %19 = vector.load %arg4[%c0_10, %c0_11] : memref<128x1xi32, #tpu.memory_space<vmem>>, vector<128x1xi32>
    %c0_i32 = arith.constant 0 : i32
    %20 = vector.broadcast %c0_i32 : i32 to vector<128x1xi32>
    %21 = arith.cmpi ne, %19, %20 : vector<128x1xi32>
    %c15_i32 = arith.constant 15 : i32
    %22 = vector.broadcast %c15_i32 : i32 to vector<128x1xi32>
    %23 = arith.cmpi ne, %19, %22 : vector<128x1xi32>
    %c0_12 = arith.constant 0 : index
    %c0_13 = arith.constant 0 : index
    %24 = vector.load %arg6[%c0_12, %c0_13] : memref<288x128xf32, #tpu.memory_space<vmem>>, vector<128x128xf32>
    %25 = vector.broadcast %8 : vector<1x128xf32> to vector<128x128xf32>
    %26 = arith.mulf %24, %25 : vector<128x128xf32>
    %27 = arith.addf %18, %26 : vector<128x128xf32>
    %c1_i32 = arith.constant 1 : i32
    %28 = tpu.dynamic_rotate %24 by %c1_i32 dim 0 : vector<128x128xf32>, i32 -> vector<128x128xf32>
    %cst_14 = arith.constant 0.000000e+00 : f32
    %29 = vector.shape_cast %21 : vector<128x1xi1> to vector<128x1xi1>
    %30 = vector.broadcast %29 : vector<128x1xi1> to vector<128x128xi1>
    %31 = vector.broadcast %cst_14 : f32 to vector<128x128xf32>
    %32 = arith.select %30, %28, %31 : vector<128x128xi1>, vector<128x128xf32>
    %33 = vector.broadcast %7 : vector<1x128xf32> to vector<128x128xf32>
    %34 = arith.mulf %32, %33 : vector<128x128xf32>
    %35 = arith.addf %27, %34 : vector<128x128xf32>
    %c127_i32 = arith.constant 127 : i32
    %36 = tpu.dynamic_rotate %24 by %c127_i32 dim 0 : vector<128x128xf32>, i32 -> vector<128x128xf32>
    %cst_15 = arith.constant 0.000000e+00 : f32
    %37 = vector.shape_cast %23 : vector<128x1xi1> to vector<128x1xi1>
    %38 = vector.broadcast %37 : vector<128x1xi1> to vector<128x128xi1>
    %39 = vector.broadcast %cst_15 : f32 to vector<128x128xf32>
    %40 = arith.select %38, %36, %39 : vector<128x128xi1>, vector<128x128xf32>
    %41 = vector.broadcast %9 : vector<1x128xf32> to vector<128x128xf32>
    %42 = arith.mulf %40, %41 : vector<128x128xf32>
    %43 = arith.addf %35, %42 : vector<128x128xf32>
    %c16_16 = arith.constant 16 : index
    %c0_17 = arith.constant 0 : index
    %44 = vector.load %arg6[%c16_16, %c0_17] : memref<288x128xf32, #tpu.memory_space<vmem>>, vector<128x128xf32>
    %45 = vector.broadcast %11 : vector<1x128xf32> to vector<128x128xf32>
    %46 = arith.mulf %44, %45 : vector<128x128xf32>
    %47 = arith.addf %43, %46 : vector<128x128xf32>
    %c1_i32_18 = arith.constant 1 : i32
    %48 = tpu.dynamic_rotate %44 by %c1_i32_18 dim 0 : vector<128x128xf32>, i32 -> vector<128x128xf32>
    %cst_19 = arith.constant 0.000000e+00 : f32
    %49 = vector.shape_cast %21 : vector<128x1xi1> to vector<128x1xi1>
    %50 = vector.broadcast %49 : vector<128x1xi1> to vector<128x128xi1>
    %51 = vector.broadcast %cst_19 : f32 to vector<128x128xf32>
    %52 = arith.select %50, %48, %51 : vector<128x128xi1>, vector<128x128xf32>
    %53 = vector.broadcast %10 : vector<1x128xf32> to vector<128x128xf32>
    %54 = arith.mulf %52, %53 : vector<128x128xf32>
    %55 = arith.addf %47, %54 : vector<128x128xf32>
    %c127_i32_20 = arith.constant 127 : i32
    %56 = tpu.dynamic_rotate %44 by %c127_i32_20 dim 0 : vector<128x128xf32>, i32 -> vector<128x128xf32>
    %cst_21 = arith.constant 0.000000e+00 : f32
    %57 = vector.shape_cast %23 : vector<128x1xi1> to vector<128x1xi1>
    %58 = vector.broadcast %57 : vector<128x1xi1> to vector<128x128xi1>
    %59 = vector.broadcast %cst_21 : f32 to vector<128x128xf32>
    %60 = arith.select %58, %56, %59 : vector<128x128xi1>, vector<128x128xf32>
    %61 = vector.broadcast %12 : vector<1x128xf32> to vector<128x128xf32>
    %62 = arith.mulf %60, %61 : vector<128x128xf32>
    %63 = arith.addf %55, %62 : vector<128x128xf32>
    %c32 = arith.constant 32 : index
    %c0_22 = arith.constant 0 : index
    %64 = vector.load %arg6[%c32, %c0_22] : memref<288x128xf32, #tpu.memory_space<vmem>>, vector<128x128xf32>
    %65 = vector.broadcast %14 : vector<1x128xf32> to vector<128x128xf32>
    %66 = arith.mulf %64, %65 : vector<128x128xf32>
    %67 = arith.addf %63, %66 : vector<128x128xf32>
    %c1_i32_23 = arith.constant 1 : i32
    %68 = tpu.dynamic_rotate %64 by %c1_i32_23 dim 0 : vector<128x128xf32>, i32 -> vector<128x128xf32>
    %cst_24 = arith.constant 0.000000e+00 : f32
    %69 = vector.shape_cast %21 : vector<128x1xi1> to vector<128x1xi1>
    %70 = vector.broadcast %69 : vector<128x1xi1> to vector<128x128xi1>
    %71 = vector.broadcast %cst_24 : f32 to vector<128x128xf32>
    %72 = arith.select %70, %68, %71 : vector<128x128xi1>, vector<128x128xf32>
    %73 = vector.broadcast %13 : vector<1x128xf32> to vector<128x128xf32>
    %74 = arith.mulf %72, %73 : vector<128x128xf32>
    %75 = arith.addf %67, %74 : vector<128x128xf32>
    %c127_i32_25 = arith.constant 127 : i32
    %76 = tpu.dynamic_rotate %64 by %c127_i32_25 dim 0 : vector<128x128xf32>, i32 -> vector<128x128xf32>
    %cst_26 = arith.constant 0.000000e+00 : f32
    %77 = vector.shape_cast %23 : vector<128x1xi1> to vector<128x1xi1>
    %78 = vector.broadcast %77 : vector<128x1xi1> to vector<128x128xi1>
    %79 = vector.broadcast %cst_26 : f32 to vector<128x128xf32>
    %80 = arith.select %78, %76, %79 : vector<128x128xi1>, vector<128x128xf32>
    %81 = vector.broadcast %15 : vector<1x128xf32> to vector<128x128xf32>
    %82 = arith.mulf %80, %81 : vector<128x128xf32>
    %83 = arith.addf %75, %82 : vector<128x128xf32>
    %c0_27 = arith.constant 0 : index
    %c0_28 = arith.constant 0 : index
    %c0_29 = arith.constant 0 : index
    %84 = vector.load %arg5[%c0_27, %c0_28, %c0_29] : memref<1x256x128xf32, #tpu.memory_space<vmem>>, vector<1x128x128xf32>
    %85 = vector.shape_cast %84 : vector<1x128x128xf32> to vector<128x128xf32>
    %86 = vector.shape_cast %83 : vector<128x128xf32> to vector<1x128x128xf32>
    tpu.vector_store %arg5[%c0_27, %c0_28, %c0_29], %86 {strides = array<i32>} : memref<1x256x128xf32, #tpu.memory_space<vmem>>, vector<1x128x128xf32>,
    %c128 = arith.constant 128 : index
    %c0_30 = arith.constant 0 : index
    %87 = vector.load %arg6[%c128, %c0_30] : memref<288x128xf32, #tpu.memory_space<vmem>>, vector<128x128xf32>
    %88 = vector.broadcast %8 : vector<1x128xf32> to vector<128x128xf32>
    %89 = arith.mulf %87, %88 : vector<128x128xf32>
    %90 = arith.addf %18, %89 : vector<128x128xf32>
    %c1_i32_31 = arith.constant 1 : i32
    %91 = tpu.dynamic_rotate %87 by %c1_i32_31 dim 0 : vector<128x128xf32>, i32 -> vector<128x128xf32>
    %cst_32 = arith.constant 0.000000e+00 : f32
    %92 = vector.shape_cast %21 : vector<128x1xi1> to vector<128x1xi1>
    %93 = vector.broadcast %92 : vector<128x1xi1> to vector<128x128xi1>
    %94 = vector.broadcast %cst_32 : f32 to vector<128x128xf32>
    %95 = arith.select %93, %91, %94 : vector<128x128xi1>, vector<128x128xf32>
    %96 = vector.broadcast %7 : vector<1x128xf32> to vector<128x128xf32>
    %97 = arith.mulf %95, %96 : vector<128x128xf32>
    %98 = arith.addf %90, %97 : vector<128x128xf32>
    %c127_i32_33 = arith.constant 127 : i32
    %99 = tpu.dynamic_rotate %87 by %c127_i32_33 dim 0 : vector<128x128xf32>, i32 -> vector<128x128xf32>
    %cst_34 = arith.constant 0.000000e+00 : f32
    %100 = vector.shape_cast %23 : vector<128x1xi1> to vector<128x1xi1>
    %101 = vector.broadcast %100 : vector<128x1xi1> to vector<128x128xi1>
    %102 = vector.broadcast %cst_34 : f32 to vector<128x128xf32>
    %103 = arith.select %101, %99, %102 : vector<128x128xi1>, vector<128x128xf32>
    %104 = vector.broadcast %9 : vector<1x128xf32> to vector<128x128xf32>
    %105 = arith.mulf %103, %104 : vector<128x128xf32>
    %106 = arith.addf %98, %105 : vector<128x128xf32>
    %c144 = arith.constant 144 : index
    %c0_35 = arith.constant 0 : index
    %107 = vector.load %arg6[%c144, %c0_35] : memref<288x128xf32, #tpu.memory_space<vmem>>, vector<128x128xf32>
    %108 = vector.broadcast %11 : vector<1x128xf32> to vector<128x128xf32>
    %109 = arith.mulf %107, %108 : vector<128x128xf32>
    %110 = arith.addf %106, %109 : vector<128x128xf32>
    %c1_i32_36 = arith.constant 1 : i32
    %111 = tpu.dynamic_rotate %107 by %c1_i32_36 dim 0 : vector<128x128xf32>, i32 -> vector<128x128xf32>
    %cst_37 = arith.constant 0.000000e+00 : f32
    %112 = vector.shape_cast %21 : vector<128x1xi1> to vector<128x1xi1>
    %113 = vector.broadcast %112 : vector<128x1xi1> to vector<128x128xi1>
    %114 = vector.broadcast %cst_37 : f32 to vector<128x128xf32>
    %115 = arith.select %113, %111, %114 : vector<128x128xi1>, vector<128x128xf32>
    %116 = vector.broadcast %10 : vector<1x128xf32> to vector<128x128xf32>
    %117 = arith.mulf %115, %116 : vector<128x128xf32>
    %118 = arith.addf %110, %117 : vector<128x128xf32>
    %c127_i32_38 = arith.constant 127 : i32
    %119 = tpu.dynamic_rotate %107 by %c127_i32_38 dim 0 : vector<128x128xf32>, i32 -> vector<128x128xf32>
    %cst_39 = arith.constant 0.000000e+00 : f32
    %120 = vector.shape_cast %23 : vector<128x1xi1> to vector<128x1xi1>
    %121 = vector.broadcast %120 : vector<128x1xi1> to vector<128x128xi1>
    %122 = vector.broadcast %cst_39 : f32 to vector<128x128xf32>
    %123 = arith.select %121, %119, %122 : vector<128x128xi1>, vector<128x128xf32>
    %124 = vector.broadcast %12 : vector<1x128xf32> to vector<128x128xf32>
    %125 = arith.mulf %123, %124 : vector<128x128xf32>
    %126 = arith.addf %118, %125 : vector<128x128xf32>
    %c160 = arith.constant 160 : index
    %c0_40 = arith.constant 0 : index
    %127 = vector.load %arg6[%c160, %c0_40] : memref<288x128xf32, #tpu.memory_space<vmem>>, vector<128x128xf32>
    %128 = vector.broadcast %14 : vector<1x128xf32> to vector<128x128xf32>
    %129 = arith.mulf %127, %128 : vector<128x128xf32>
    %130 = arith.addf %126, %129 : vector<128x128xf32>
    %c1_i32_41 = arith.constant 1 : i32
    %131 = tpu.dynamic_rotate %127 by %c1_i32_41 dim 0 : vector<128x128xf32>, i32 -> vector<128x128xf32>
    %cst_42 = arith.constant 0.000000e+00 : f32
    %132 = vector.shape_cast %21 : vector<128x1xi1> to vector<128x1xi1>
    %133 = vector.broadcast %132 : vector<128x1xi1> to vector<128x128xi1>
    %134 = vector.broadcast %cst_42 : f32 to vector<128x128xf32>
    %135 = arith.select %133, %131, %134 : vector<128x128xi1>, vector<128x128xf32>
    %136 = vector.broadcast %13 : vector<1x128xf32> to vector<128x128xf32>
    %137 = arith.mulf %135, %136 : vector<128x128xf32>
    %138 = arith.addf %130, %137 : vector<128x128xf32>
    %c127_i32_43 = arith.constant 127 : i32
    %139 = tpu.dynamic_rotate %127 by %c127_i32_43 dim 0 : vector<128x128xf32>, i32 -> vector<128x128xf32>
    %cst_44 = arith.constant 0.000000e+00 : f32
    %140 = vector.shape_cast %23 : vector<128x1xi1> to vector<128x1xi1>
    %141 = vector.broadcast %140 : vector<128x1xi1> to vector<128x128xi1>
    %142 = vector.broadcast %cst_44 : f32 to vector<128x128xf32>
    %143 = arith.select %141, %139, %142 : vector<128x128xi1>, vector<128x128xf32>
    %144 = vector.broadcast %15 : vector<1x128xf32> to vector<128x128xf32>
    %145 = arith.mulf %143, %144 : vector<128x128xf32>
    %146 = arith.addf %138, %145 : vector<128x128xf32>
    %c0_45 = arith.constant 0 : index
    %c128_46 = arith.constant 128 : index
    %c0_47 = arith.constant 0 : index
    %147 = vector.load %arg5[%c0_45, %c128_46, %c0_47] : memref<1x256x128xf32, #tpu.memory_space<vmem>>, vector<1x128x128xf32>
    %148 = vector.shape_cast %147 : vector<1x128x128xf32> to vector<128x128xf32>
    %149 = vector.shape_cast %146 : vector<128x128xf32> to vector<1x128x128xf32>
    tpu.vector_store %arg5[%c0_45, %c128_46, %c0_47], %149 {strides = array<i32>} : memref<1x256x128xf32, #tpu.memory_space<vmem>>, vector<1x128x128xf32>,
    return
  }
  func.func @transform_0(%arg0: i32) -> (i32, i32, i32) {
    %c0_i32 = arith.constant 0 : i32
    %c0_i32_0 = arith.constant 0 : i32
    %c0_i32_1 = arith.constant 0 : i32
    return %arg0, %c0_i32, %c0_i32_0 : i32, i32, i32
  }
  func.func @transform_1(%arg0: i32) -> (i32, i32) {
    %c0_i32 = arith.constant 0 : i32
    %c0_i32_0 = arith.constant 0 : i32
    %c0_i32_1 = arith.constant 0 : i32
    return %c0_i32, %c0_i32_0 : i32, i32
  }
  func.func @transform_2(%arg0: i32) -> (i32, i32) {
    %c0_i32 = arith.constant 0 : i32
    %c0_i32_0 = arith.constant 0 : i32
    %c0_i32_1 = arith.constant 0 : i32
    return %c0_i32, %c0_i32_0 : i32, i32
  }
  func.func @transform_3(%arg0: i32) -> (i32, i32) {
    %c0_i32 = arith.constant 0 : i32
    %c0_i32_0 = arith.constant 0 : i32
    %c0_i32_1 = arith.constant 0 : i32
    return %c0_i32, %c0_i32_0 : i32, i32
  }
  func.func @transform_4(%arg0: i32) -> (i32, i32, i32) {
    %c0_i32 = arith.constant 0 : i32
    %c0_i32_0 = arith.constant 0 : i32
    %c0_i32_1 = arith.constant 0 : i32
    return %arg0, %c0_i32, %c0_i32_0 : i32, i32, i32
  }
}

</mosaic_0001>

<llo_original>
// kernel: tpu_custom_call.1
$region0: #{tpu_custom_call.1}
  #allocation0 [shape = 'u32[]', space=smem, size = 0x4, offset = 0x4, fixed_abs, tag = 'smem constant byte address 0x4 - core index']
  #allocation1 [shape = 'u32[144,128]{1,0:T(1,128)}', space=vmem, size = 0x12000, scoped, tag = 'internal scratch']
  #allocation2 [shape = 'f32[288,128]{1,0:T(8,128)}', space=vmem, size = 0x24000, scoped, tag = 'scratch operand']
  %s0 = inlined_call_operand.hbm [shape: f32[2,256,128], index: 0, kind: input, shape index: {}]
  %s1 = inlined_call_operand.vmem [shape: f32[9,128], index: 1, kind: input, shape index: {}]
  %s2 = inlined_call_operand.vmem [shape: f32[1,128], index: 2, kind: input, shape index: {}]
  %s3 = inlined_call_operand.vmem [shape: s32[128,1], index: 3, kind: input, shape index: {}]
  %s4 = inlined_call_operand.hbm [shape: f32[2,256,128], index: 4, kind: output, shape index: {}]
  %s5 = sld [smem:[#allocation0]]
  $region53: #{tpu_custom_call.1} parent=0
    _
  %s7 = ssub.s32 1, %s5
  %s8 = scalar_select 0, %s7, %s5
  $region1: #{tpu_custom_call.1} parent=0
    #allocation3 [shape = 'u8[262144]{0}', space=vmem, size = 0x40000, scoped, tag = 'input window, operand 0']
    #allocation4 [shape = 's32[2]{0}', space=sflag, size = 0x8, scoped, tag = 'scoped memory for tpu_custom_call.1']
    #allocation5 [shape = 's32[2]{0}', space=sflag, size = 0x8, scoped, tag = 'scoped memory for tpu_custom_call.1']
    #allocation6 [shape = 'u8[262144]{0}', space=vmem, size = 0x40000, scoped, tag = 'output window, operand 0']
    %9 = vsyncpa [#allocation4], 0
    %s10 = scalar_lea.sflag [#allocation4], 1
    %11 = vsyncpa %s10, 0
    %12 = vsyncpa [#allocation5], 0
    %s13 = scalar_lea.sflag [#allocation5], 1
    %14 = vsyncpa %s13, 0
    loop: start=0, step=1, limit=4
    $region2: #{tpu_custom_call.1} parent=1 // loop_pre_header
      _
    $region3: #{tpu_custom_call.1} parent=1 // loop_header
      %s16 = sphi 0, %s20
      %p17 = scmp.ge.s32.totalorder %s16, 4
      %s26 = sphi 0, %s28
      %s29 = sphi 0, %s26
      %s30 = sphi 0, %s29
      %s46 = sphi 0, %s30
      %s50 = sphi 0, %s50
      %s52 = sphi 0, %s50
      %s53 = sphi 0, %s52
      %s67 = sphi 0, %s53
      %s71 = sphi 0, %s71
      %s73 = sphi 0, %s71
      %s74 = sphi 0, %s73
      %s88 = sphi 0, %s74
      %s92 = sphi 0, %s92
      %s94 = sphi 0, %s92
      %s95 = sphi 0, %s94
      %s109 = sphi 0, %s95
      %s115 = sphi 0, %s117
      %s118 = sphi 0, %s115
      %s119 = sphi 0, %s118
      %s135 = sphi 0, %s119
    $region4: #{tpu_custom_call.1} parent=1 // loop_header_branch
      %19 = sbr.rel (%p17) target = $region8
    $region5: #{tpu_custom_call.1} parent=1 // loop_body
      %s21 = ssub.s32 %s16, 1
      %s22 = ssub.s32 %s16, 2
      %s23 = sadd.s32 %s16, 1
      %s24 = ssub.s32 %s16, %s23
      %p25 = scmp.eq.s32.totalorder %s24, 0
      %s27 = sadd.s32 %s26, 1
      %s28 = scalar_select %p25, %s26, %s27
      %p31 = pneg %p25
      %p32 = scmp.eq.s32.totalorder %s16, 1
      %p33 = por %p31, %p32
      %p34 = scmp.ne.s32.totalorder %s26, %s29
      %p35 = scmp.eq.s32.totalorder %s16, 0
      %p36 = por %p34, %p35
      %p37 = scmp.ne.s32.totalorder %s26, %s29
      %p38 = scmp.eq.s32.totalorder %s21, 1
      %p39 = por %p37, %p38
      %p40 = scmp.ne.s32.totalorder %s29, %s30
      %p41 = scmp.eq.s32.totalorder %s21, 0
      %p42 = por %p40, %p41
      %p43 = scmp.ne.s32.totalorder %s29, %s30
      %p44 = scmp.eq.s32.totalorder %s22, 1
      %p45 = por %p43, %p44
      %p47 = scmp.ne.s32.totalorder %s30, %s46
      %p48 = scmp.eq.s32.totalorder %s22, 0
      %p49 = por %p47, %p48
      %s51 = sadd.s32 %s50, 1
      %p54 = scmp.eq.s32.totalorder %s16, 1
      %p55 = scmp.ne.s32.totalorder %s50, %s52
      %p56 = scmp.eq.s32.totalorder %s16, 0
      %p57 = por %p55, %p56
      %p58 = scmp.ne.s32.totalorder %s50, %s52
      %p59 = scmp.eq.s32.totalorder %s21, 1
      %p60 = por %p58, %p59
      %p61 = scmp.ne.s32.totalorder %s52, %s53
      %p62 = scmp.eq.s32.totalorder %s21, 0
      %p63 = por %p61, %p62
      %p64 = scmp.ne.s32.totalorder %s52, %s53
      %p65 = scmp.eq.s32.totalorder %s22, 1
      %p66 = por %p64, %p65
      %p68 = scmp.ne.s32.totalorder %s53, %s67
      %p69 = scmp.eq.s32.totalorder %s22, 0
      %p70 = por %p68, %p69
      %s72 = sadd.s32 %s71, 1
      %p75 = scmp.eq.s32.totalorder %s16, 1
      %p76 = scmp.ne.s32.totalorder %s71, %s73
      %p77 = scmp.eq.s32.totalorder %s16, 0
      %p78 = por %p76, %p77
      %p79 = scmp.ne.s32.totalorder %s71, %s73
      %p80 = scmp.eq.s32.totalorder %s21, 1
      %p81 = por %p79, %p80
      %p82 = scmp.ne.s32.totalorder %s73, %s74
      %p83 = scmp.eq.s32.totalorder %s21, 0
      %p84 = por %p82, %p83
      %p85 = scmp.ne.s32.totalorder %s73, %s74
      %p86 = scmp.eq.s32.totalorder %s22, 1
      %p87 = por %p85, %p86
      %p89 = scmp.ne.s32.totalorder %s74, %s88
      %p90 = scmp.eq.s32.totalorder %s22, 0
      %p91 = por %p89, %p90
      %s93 = sadd.s32 %s92, 1
      %p96 = scmp.eq.s32.totalorder %s16, 1
      %p97 = scmp.ne.s32.totalorder %s92, %s94
      %p98 = scmp.eq.s32.totalorder %s16, 0
      %p99 = por %p97, %p98
      %p100 = scmp.ne.s32.totalorder %s92, %s94
      %p101 = scmp.eq.s32.totalorder %s21, 1
      %p102 = por %p100, %p101
      %p103 = scmp.ne.s32.totalorder %s94, %s95
      %p104 = scmp.eq.s32.totalorder %s21, 0
      %p105 = por %p103, %p104
      %p106 = scmp.ne.s32.totalorder %s94, %s95
      %p107 = scmp.eq.s32.totalorder %s22, 1
      %p108 = por %p106, %p107
      %p110 = scmp.ne.s32.totalorder %s95, %s109
      %p111 = scmp.eq.s32.totalorder %s22, 0
      %p112 = por %p110, %p111
      %s113 = ssub.s32 %s16, %s23
      %p114 = scmp.eq.s32.totalorder %s113, 0
      %s116 = sadd.s32 %s115, 1
      %s117 = scalar_select %p114, %s115, %s116
      %p120 = pneg %p114
      %p121 = scmp.eq.s32.totalorder %s16, 1
      %p122 = por %p120, %p121
      %p123 = scmp.ne.s32.totalorder %s115, %s118
      %p124 = scmp.eq.s32.totalorder %s16, 0
      %p125 = por %p123, %p124
      %p126 = scmp.ne.s32.totalorder %s115, %s118
      %p127 = scmp.eq.s32.totalorder %s21, 1
      %p128 = por %p126, %p127
      %p129 = scmp.ne.s32.totalorder %s118, %s119
      %p130 = scmp.eq.s32.totalorder %s21, 0
      %p131 = por %p129, %p130
      %p132 = scmp.ne.s32.totalorder %s118, %s119
      %p133 = scmp.eq.s32.totalorder %s22, 1
      %p134 = por %p132, %p133
      %p136 = scmp.ne.s32.totalorder %s119, %s135
      %p137 = scmp.eq.s32.totalorder %s22, 0
      %p138 = por %p136, %p137
      %p139 = scmp.le.s32.totalorder 1, %s16
      %p140 = scmp.lt.s32.totalorder %s16, 3
      %p141 = pnand %p139, %p140
      %p142 = pneg %p141
      // Predicated region
      $region9: #{tpu_custom_call.1} parent=5 // pred_check
        _
      $region10: #{tpu_custom_call.1} parent=5 // pred_check_branch
        %144 = sbr.rel (%p141) target = $region12
      $region11: #{tpu_custom_call.1} parent=5 // pred_region
        %s145 = ssub.s32 %s16, 1
        // Predicated region
        $region13: #{tpu_custom_call.1} parent=11 // pred_check
          %p146 = pneg %p63
        $region14: #{tpu_custom_call.1} parent=11 // pred_check_branch
          %148 = sbr.rel (%p146) target = $region16
        $region15: #{tpu_custom_call.1} parent=11 // pred_region
          _
        $region16: #{tpu_custom_call.1} parent=11 // pred_fallthru
          _
        // Predicated region
        $region17: #{tpu_custom_call.1} parent=11 // pred_check
          %p149 = pneg %p84
        $region18: #{tpu_custom_call.1} parent=11 // pred_check_branch
          %151 = sbr.rel (%p149) target = $region20
        $region19: #{tpu_custom_call.1} parent=11 // pred_region
          _
        $region20: #{tpu_custom_call.1} parent=11 // pred_fallthru
          _
        // Predicated region
        $region21: #{tpu_custom_call.1} parent=11 // pred_check
          %p152 = pneg %p105
        $region22: #{tpu_custom_call.1} parent=11 // pred_check_branch
          %154 = sbr.rel (%p152) target = $region24
        $region23: #{tpu_custom_call.1} parent=11 // pred_region
          _
        $region24: #{tpu_custom_call.1} parent=11 // pred_fallthru
          _
      $region12: #{tpu_custom_call.1} parent=5 // pred_fallthru
        _
      %p155 = scmp.lt.s32.totalorder %s16, 2
      // Predicated region
      $region25: #{tpu_custom_call.1} parent=5 // pred_check
        %p156 = pneg %p155
      $region26: #{tpu_custom_call.1} parent=5 // pred_check_branch
        %158 = sbr.rel (%p156) target = $region28
      $region27: #{tpu_custom_call.1} parent=5 // pred_region
        // Predicated region
        $region29: #{tpu_custom_call.1} parent=27 // pred_check
          %p159 = pneg %p36
        $region30: #{tpu_custom_call.1} parent=27 // pred_check_branch
          %161 = sbr.rel (%p159) target = $region32
        $region31: #{tpu_custom_call.1} parent=27 // pred_region
          %s162 = sand.u32 %s26, 1
          %s163 = scalar_lea.sflag [#allocation4], %s162
          %s164 = sand.u32 %s26, 1
          %s165 = smul.addr %s164, 256
          %s166 = scalar_lea.vmem [#allocation3], %s165
          %s168 = ssub.s32 4096, 4096
          %169 = vsyncadd %s163, %s168
          %s170 = smul.addr %s16, 32
          %s171 = smul.addr %s170, 128
          %s172 = scalar_lea.hbm %s0, %s171
          %s173 = sshll.u32 %s166, 4
          %s174 = int_to_ptr.vmem [resolvable:$true] %s173
          %179 = dma.hbm_to_vmem [thread:$0]  %s172, 4096, %s174, %s163, 128, 128, 8
        $region32: #{tpu_custom_call.1} parent=27 // pred_fallthru
          _
      $region28: #{tpu_custom_call.1} parent=5 // pred_fallthru
        _
      %p180 = scmp.le.s32.totalorder 1, %s16
      %p181 = scmp.lt.s32.totalorder %s16, 3
      %p182 = pnand %p180, %p181
      %p183 = pneg %p182
      // Predicated region
      $region33: #{tpu_custom_call.1} parent=5 // pred_check
        _
      $region34: #{tpu_custom_call.1} parent=5 // pred_check_branch
        %185 = sbr.rel (%p182) target = $region36
      $region35: #{tpu_custom_call.1} parent=5 // pred_region
        %s186 = ssub.s32 %s16, 1
        %s187 = sand.u32 %s29, 1
        %s188 = scalar_lea.sflag [#allocation4], %s187
        %s189 = sand.u32 %s29, 1
        %s190 = smul.addr %s189, 256
        %s191 = scalar_lea.vmem [#allocation3], %s190
        // Predicated region
        $region37: #{tpu_custom_call.1} parent=35 // pred_check
          %p192 = pneg %p42
        $region38: #{tpu_custom_call.1} parent=35 // pred_check_branch
          %194 = sbr.rel (%p192) target = $region40
        $region39: #{tpu_custom_call.1} parent=35 // pred_region
          %195 = dma.done %s188, 4096
        $region40: #{tpu_custom_call.1} parent=35 // pred_fallthru
          _
        %s196 = sand.u32 %s29, 1
        %s197 = scalar_lea.sflag [#allocation4], %s196
        %s198 = sand.u32 %s29, 1
        %s199 = smul.addr %s198, 256
        %s200 = scalar_lea.vmem [#allocation3], %s199
        %p201 = pneg %p42
        %p202 = pneg %p39
        %p203 = pneg %p63
        %p204 = pneg %p60
        %p205 = pneg %p84
        %p206 = pneg %p81
        %p207 = pneg %p105
        %p208 = pneg %p102
        %p209 = pneg %p131
        %p210 = pneg %p128
        %s211 = sand.u32 %s118, 1
        %s212 = scalar_lea.sflag [#allocation5], %s211
        %s213 = sand.u32 %s118, 1
        %s214 = smul.addr %s213, 256
        %s215 = scalar_lea.vmem [#allocation6], %s214
        %216 = vst [vmem:[#allocation2] sm:$0xff] 0.0
        %217 = vst [vmem:[#allocation2 + $0x8] sm:$0xff] 0.0
        %218 = vst [vmem:[#allocation2 + $0x110] sm:$0xff] 0.0
        %219 = vst [vmem:[#allocation2 + $0x118] sm:$0xff] 0.0
        %v220 = vld [vmem:[%s191] sm:$0xff]
        %v221 = vld [vmem:[%s191 + $0x8] sm:$0xff]
        %v222 = vld [vmem:[%s191 + $0x10] sm:$0xff]
        %v223 = vld [vmem:[%s191 + $0x18] sm:$0xff]
        %v224 = vld [vmem:[%s191 + $0x20] sm:$0xff]
        %v225 = vld [vmem:[%s191 + $0x28] sm:$0xff]
        %v226 = vld [vmem:[%s191 + $0x30] sm:$0xff]
        %v227 = vld [vmem:[%s191 + $0x38] sm:$0xff]
        %v228 = vld [vmem:[%s191 + $0x40] sm:$0xff]
        %v229 = vld [vmem:[%s191 + $0x48] sm:$0xff]
        %v230 = vld [vmem:[%s191 + $0x50] sm:$0xff]
        %v231 = vld [vmem:[%s191 + $0x58] sm:$0xff]
        %v232 = vld [vmem:[%s191 + $0x60] sm:$0xff]
        %v233 = vld [vmem:[%s191 + $0x68] sm:$0xff]
        %v234 = vld [vmem:[%s191 + $0x70] sm:$0xff]
        %v235 = vld [vmem:[%s191 + $0x78] sm:$0xff]
        %v236 = vld [vmem:[%s191 + $0x80] sm:$0xff]
        %v237 = vld [vmem:[%s191 + $0x88] sm:$0xff]
        %v238 = vld [vmem:[%s191 + $0x90] sm:$0xff]
        %v239 = vld [vmem:[%s191 + $0x98] sm:$0xff]
        %v240 = vld [vmem:[%s191 + $0xa0] sm:$0xff]
        %v241 = vld [vmem:[%s191 + $0xa8] sm:$0xff]
        %v242 = vld [vmem:[%s191 + $0xb0] sm:$0xff]
        %v243 = vld [vmem:[%s191 + $0xb8] sm:$0xff]
        %v244 = vld [vmem:[%s191 + $0xc0] sm:$0xff]
        %v245 = vld [vmem:[%s191 + $0xc8] sm:$0xff]
        %v246 = vld [vmem:[%s191 + $0xd0] sm:$0xff]
        %v247 = vld [vmem:[%s191 + $0xd8] sm:$0xff]
        %v248 = vld [vmem:[%s191 + $0xe0] sm:$0xff]
        %v249 = vld [vmem:[%s191 + $0xe8] sm:$0xff]
        %v250 = vld [vmem:[%s191 + $0xf0] sm:$0xff]
        %v251 = vld [vmem:[%s191 + $0xf8] sm:$0xff]
        %252 = vst [vmem:[#allocation2 + $0x10] sm:$0xff] %v220
        %253 = vst [vmem:[#allocation2 + $0x18] sm:$0xff] %v221
        %254 = vst [vmem:[#allocation2 + $0x20] sm:$0xff] %v222
        %255 = vst [vmem:[#allocation2 + $0x28] sm:$0xff] %v223
        %256 = vst [vmem:[#allocation2 + $0x30] sm:$0xff] %v224
        %257 = vst [vmem:[#allocation2 + $0x38] sm:$0xff] %v225
        %258 = vst [vmem:[#allocation2 + $0x40] sm:$0xff] %v226
        %259 = vst [vmem:[#allocation2 + $0x48] sm:$0xff] %v227
        %260 = vst [vmem:[#allocation2 + $0x50] sm:$0xff] %v228
        %261 = vst [vmem:[#allocation2 + $0x58] sm:$0xff] %v229
        %262 = vst [vmem:[#allocation2 + $0x60] sm:$0xff] %v230
        %263 = vst [vmem:[#allocation2 + $0x68] sm:$0xff] %v231
        %264 = vst [vmem:[#allocation2 + $0x70] sm:$0xff] %v232
        %265 = vst [vmem:[#allocation2 + $0x78] sm:$0xff] %v233
        %266 = vst [vmem:[#allocation2 + $0x80] sm:$0xff] %v234
        %267 = vst [vmem:[#allocation2 + $0x88] sm:$0xff] %v235
        %268 = vst [vmem:[#allocation2 + $0x90] sm:$0xff] %v236
        %269 = vst [vmem:[#allocation2 + $0x98] sm:$0xff] %v237
        %270 = vst [vmem:[#allocation2 + $0xa0] sm:$0xff] %v238
        %271 = vst [vmem:[#allocation2 + $0xa8] sm:$0xff] %v239
        %272 = vst [vmem:[#allocation2 + $0xb0] sm:$0xff] %v240
        %273 = vst [vmem:[#allocation2 + $0xb8] sm:$0xff] %v241
        %274 = vst [vmem:[#allocation2 + $0xc0] sm:$0xff] %v242
        %275 = vst [vmem:[#allocation2 + $0xc8] sm:$0xff] %v243
        %276 = vst [vmem:[#allocation2 + $0xd0] sm:$0xff] %v244
        %277 = vst [vmem:[#allocation2 + $0xd8] sm:$0xff] %v245
        %278 = vst [vmem:[#allocation2 + $0xe0] sm:$0xff] %v246
        %279 = vst [vmem:[#allocation2 + $0xe8] sm:$0xff] %v247
        %280 = vst [vmem:[#allocation2 + $0xf0] sm:$0xff] %v248
        %281 = vst [vmem:[#allocation2 + $0xf8] sm:$0xff] %v249
        %282 = vst [vmem:[#allocation2 + $0x100] sm:$0xff] %v250
        %283 = vst [vmem:[#allocation2 + $0x108] sm:$0xff] %v251
        %v284 = vld [vmem:[%s1] sm:$0xff]
        %v285 = vld [vmem:[%s1 + $0x8] sm:$0x1]
        %v286 = vld [vmem:[%s2] sm:$0x1]
        %v288 = vlaneseq
        %v289 = vshrl.u32 %v288, 7
        %v290 = vsub.s32 0, %v289
        %v291 = vrot.slane %v286, %v290
        %v293 = vld [vmem:[%s3] sm:$0xff]
        %v294 = vld [vmem:[%s3 + $0x8] sm:$0xff]
        %v295 = vld [vmem:[%s3 + $0x10] sm:$0xff]
        %v296 = vld [vmem:[%s3 + $0x18] sm:$0xff]
        %v297 = vld [vmem:[%s3 + $0x20] sm:$0xff]
        %v298 = vld [vmem:[%s3 + $0x28] sm:$0xff]
        %v299 = vld [vmem:[%s3 + $0x30] sm:$0xff]
        %v300 = vld [vmem:[%s3 + $0x38] sm:$0xff]
        %v301 = vld [vmem:[%s3 + $0x40] sm:$0xff]
        %v302 = vld [vmem:[%s3 + $0x48] sm:$0xff]
        %v303 = vld [vmem:[%s3 + $0x50] sm:$0xff]
        %v304 = vld [vmem:[%s3 + $0x58] sm:$0xff]
        %v305 = vld [vmem:[%s3 + $0x60] sm:$0xff]
        %v306 = vld [vmem:[%s3 + $0x68] sm:$0xff]
        %v307 = vld [vmem:[%s3 + $0x70] sm:$0xff]
        %v308 = vld [vmem:[%s3 + $0x78] sm:$0xff]
        %vm309 = vcmp.ne.s32.totalorder %v293, 0
        %vm310 = vcmp.ne.s32.totalorder %v294, 0
        %vm311 = vcmp.ne.s32.totalorder %v295, 0
        %vm312 = vcmp.ne.s32.totalorder %v296, 0
        %vm313 = vcmp.ne.s32.totalorder %v297, 0
        %vm314 = vcmp.ne.s32.totalorder %v298, 0
        %vm315 = vcmp.ne.s32.totalorder %v299, 0
        %vm316 = vcmp.ne.s32.totalorder %v300, 0
        %vm317 = vcmp.ne.s32.totalorder %v301, 0
        %vm318 = vcmp.ne.s32.totalorder %v302, 0
        %vm319 = vcmp.ne.s32.totalorder %v303, 0
        %vm320 = vcmp.ne.s32.totalorder %v304, 0
        %vm321 = vcmp.ne.s32.totalorder %v305, 0
        %vm322 = vcmp.ne.s32.totalorder %v306, 0
        %vm323 = vcmp.ne.s32.totalorder %v307, 0
        %vm324 = vcmp.ne.s32.totalorder %v308, 0
        %vm325 = vcmp.ne.s32.totalorder %v293, 15
        %vm326 = vcmp.ne.s32.totalorder %v294, 15
        %vm327 = vcmp.ne.s32.totalorder %v295, 15
        %vm328 = vcmp.ne.s32.totalorder %v296, 15
        %vm329 = vcmp.ne.s32.totalorder %v297, 15
        %vm330 = vcmp.ne.s32.totalorder %v298, 15
        %vm331 = vcmp.ne.s32.totalorder %v299, 15
        %vm332 = vcmp.ne.s32.totalorder %v300, 15
        %vm333 = vcmp.ne.s32.totalorder %v301, 15
        %vm334 = vcmp.ne.s32.totalorder %v302, 15
        %vm335 = vcmp.ne.s32.totalorder %v303, 15
        %vm336 = vcmp.ne.s32.totalorder %v304, 15
        %vm337 = vcmp.ne.s32.totalorder %v305, 15
        %vm338 = vcmp.ne.s32.totalorder %v306, 15
        %vm339 = vcmp.ne.s32.totalorder %v307, 15
        %vm340 = vcmp.ne.s32.totalorder %v308, 15
        %v341 = vld [vmem:[#allocation2] sm:$0xff]
        %v342 = vld [vmem:[#allocation2 + $0x8] sm:$0xff]
        %v343 = vld [vmem:[#allocation2 + $0x10] sm:$0xff]
        %v344 = vld [vmem:[#allocation2 + $0x18] sm:$0xff]
        %v345 = vld [vmem:[#allocation2 + $0x20] sm:$0xff]
        %v346 = vld [vmem:[#allocation2 + $0x28] sm:$0xff]
        %v347 = vld [vmem:[#allocation2 + $0x30] sm:$0xff]
        %v348 = vld [vmem:[#allocation2 + $0x38] sm:$0xff]
        %v349 = vld [vmem:[#allocation2 + $0x40] sm:$0xff]
        %v350 = vld [vmem:[#allocation2 + $0x48] sm:$0xff]
        %v351 = vld [vmem:[#allocation2 + $0x50] sm:$0xff]
        %v352 = vld [vmem:[#allocation2 + $0x58] sm:$0xff]
        %v353 = vld [vmem:[#allocation2 + $0x60] sm:$0xff]
        %v354 = vld [vmem:[#allocation2 + $0x68] sm:$0xff]
        %v355 = vld [vmem:[#allocation2 + $0x70] sm:$0xff]
        %v356 = vld [vmem:[#allocation2 + $0x78] sm:$0xff]
        %v357 = vlaneseq
        %v358 = vshrl.u32 %v357, 7
        %v359 = vsub.s32 1, %v358
        %v360 = vrot.slane %v284, %v359
        %v361 = vmul.f32 %v341, %v360
        %v362 = vmul.f32 %v342, %v360
        %v363 = vmul.f32 %v343, %v360
        %v364 = vmul.f32 %v344, %v360
        %v365 = vmul.f32 %v345, %v360
        %v366 = vmul.f32 %v346, %v360
        %v367 = vmul.f32 %v347, %v360
        %v368 = vmul.f32 %v348, %v360
        %v369 = vmul.f32 %v349, %v360
        %v370 = vmul.f32 %v350, %v360
        %v371 = vmul.f32 %v351, %v360
        %v372 = vmul.f32 %v352, %v360
        %v373 = vmul.f32 %v353, %v360
        %v374 = vmul.f32 %v354, %v360
        %v375 = vmul.f32 %v355, %v360
        %v376 = vmul.f32 %v356, %v360
        %v377 = vadd.f32 %v291, %v361
        %v378 = vadd.f32 %v291, %v362
        %v379 = vadd.f32 %v291, %v363
        %v380 = vadd.f32 %v291, %v364
        %v381 = vadd.f32 %v291, %v365
        %v382 = vadd.f32 %v291, %v366
        %v383 = vadd.f32 %v291, %v367
        %v384 = vadd.f32 %v291, %v368
        %v385 = vadd.f32 %v291, %v369
        %v386 = vadd.f32 %v291, %v370
        %v387 = vadd.f32 %v291, %v371
        %v388 = vadd.f32 %v291, %v372
        %v389 = vadd.f32 %v291, %v373
        %v390 = vadd.f32 %v291, %v374
        %v391 = vadd.f32 %v291, %v375
        %v392 = vadd.f32 %v291, %v376
        %v393 = vrot.slane %v341, 7
        %v394 = vrot.slane %v342, 7
        %v395 = vrot.slane %v343, 7
        %v396 = vrot.slane %v344, 7
        %v397 = vrot.slane %v345, 7
        %v398 = vrot.slane %v346, 7
        %v399 = vrot.slane %v347, 7
        %v400 = vrot.slane %v348, 7
        %v401 = vrot.slane %v349, 7
        %v402 = vrot.slane %v350, 7
        %v403 = vrot.slane %v351, 7
        %v404 = vrot.slane %v352, 7
        %v405 = vrot.slane %v353, 7
        %v406 = vrot.slane %v354, 7
        %v407 = vrot.slane %v355, 7
        %v408 = vrot.slane %v356, 7
        %v409 = vlaneseq
        %v410 = vshrl.u32 %v409, 7
        %vm411 = vcmp.lt.s32.totalorder %v410, 1
        %v412 = vsel %vm411, %v407, %v408
        %v413 = vsel %vm411, %v406, %v407
        %v414 = vsel %vm411, %v405, %v406
        %v415 = vsel %vm411, %v404, %v405
        %v416 = vsel %vm411, %v403, %v404
        %v417 = vsel %vm411, %v402, %v403
        %v418 = vsel %vm411, %v401, %v402
        %v419 = vsel %vm411, %v400, %v401
        %v420 = vsel %vm411, %v399, %v400
        %v421 = vsel %vm411, %v398, %v399
        %v422 = vsel %vm411, %v397, %v398
        %v423 = vsel %vm411, %v396, %v397
        %v424 = vsel %vm411, %v395, %v396
        %v425 = vsel %vm411, %v394, %v395
        %v426 = vsel %vm411, %v393, %v394
        %v427 = vsel %vm411, %v408, %v393
        %v428 = vsel %vm309, 1, 0
        %v429 = vsel %vm310, 1, 0
        %v430 = vsel %vm311, 1, 0
        %v431 = vsel %vm312, 1, 0
        %v432 = vsel %vm313, 1, 0
        %v433 = vsel %vm314, 1, 0
        %v434 = vsel %vm315, 1, 0
        %v435 = vsel %vm316, 1, 0
        %v436 = vsel %vm317, 1, 0
        %v437 = vsel %vm318, 1, 0
        %v438 = vsel %vm319, 1, 0
        %v439 = vsel %vm320, 1, 0
        %v440 = vsel %vm321, 1, 0
        %v441 = vsel %vm322, 1, 0
        %v442 = vsel %vm323, 1, 0
        %v443 = vsel %vm324, 1, 0
        %444 = vset.pattern.permute.xlu0 0
        %445 = vperm.xlu0 %444, %v428
        %v446 = vpop.permute.xlu0 %445
        %447 = vset.pattern.permute.xlu0 0
        %448 = vperm.xlu0 %447, %v429
        %v449 = vpop.permute.xlu0 %448
        %450 = vset.pattern.permute.xlu0 0
        %451 = vperm.xlu0 %450, %v430
        %v452 = vpop.permute.xlu0 %451
        %453 = vset.pattern.permute.xlu0 0
        %454 = vperm.xlu0 %453, %v431
        %v455 = vpop.permute.xlu0 %454
        %456 = vset.pattern.permute.xlu0 0
        %457 = vperm.xlu0 %456, %v432
        %v458 = vpop.permute.xlu0 %457
        %459 = vset.pattern.permute.xlu0 0
        %460 = vperm.xlu0 %459, %v433
        %v461 = vpop.permute.xlu0 %460
        %462 = vset.pattern.permute.xlu0 0
        %463 = vperm.xlu0 %462, %v434
        %v464 = vpop.permute.xlu0 %463
        %465 = vset.pattern.permute.xlu0 0
        %466 = vperm.xlu0 %465, %v435
        %v467 = vpop.permute.xlu0 %466
        %468 = vset.pattern.permute.xlu0 0
        %469 = vperm.xlu0 %468, %v436
        %v470 = vpop.permute.xlu0 %469
        %471 = vset.pattern.permute.xlu0 0
        %472 = vperm.xlu0 %471, %v437
        %v473 = vpop.permute.xlu0 %472
        %474 = vset.pattern.permute.xlu0 0
        %475 = vperm.xlu0 %474, %v438
        %v476 = vpop.permute.xlu0 %475
        %477 = vset.pattern.permute.xlu0 0
        %478 = vperm.xlu0 %477, %v439
        %v479 = vpop.permute.xlu0 %478
        %480 = vset.pattern.permute.xlu0 0
        %481 = vperm.xlu0 %480, %v440
        %v482 = vpop.permute.xlu0 %481
        %483 = vset.pattern.permute.xlu0 0
        %484 = vperm.xlu0 %483, %v441
        %v485 = vpop.permute.xlu0 %484
        %486 = vset.pattern.permute.xlu0 0
        %487 = vperm.xlu0 %486, %v442
        %v488 = vpop.permute.xlu0 %487
        %489 = vset.pattern.permute.xlu0 0
        %490 = vperm.xlu0 %489, %v443
        %v491 = vpop.permute.xlu0 %490
        %vm492 = vcmp.eq.s32.totalorder %v446, 1
        %vm493 = vcmp.eq.s32.totalorder %v449, 1
        %vm494 = vcmp.eq.s32.totalorder %v452, 1
        %vm495 = vcmp.eq.s32.totalorder %v455, 1
        %vm496 = vcmp.eq.s32.totalorder %v458, 1
        %vm497 = vcmp.eq.s32.totalorder %v461, 1
        %vm498 = vcmp.eq.s32.totalorder %v464, 1
        %vm499 = vcmp.eq.s32.totalorder %v467, 1
        %vm500 = vcmp.eq.s32.totalorder %v470, 1
        %vm501 = vcmp.eq.s32.totalorder %v473, 1
        %vm502 = vcmp.eq.s32.totalorder %v476, 1
        %vm503 = vcmp.eq.s32.totalorder %v479, 1
        %vm504 = vcmp.eq.s32.totalorder %v482, 1
        %vm505 = vcmp.eq.s32.totalorder %v485, 1
        %vm506 = vcmp.eq.s32.totalorder %v488, 1
        %vm507 = vcmp.eq.s32.totalorder %v491, 1
        %v508 = vsel %vm492, %v427, 0.0
        %v509 = vsel %vm493, %v426, 0.0
        %v510 = vsel %vm494, %v425, 0.0
        %v511 = vsel %vm495, %v424, 0.0
        %v512 = vsel %vm496, %v423, 0.0
        %v513 = vsel %vm497, %v422, 0.0
        %v514 = vsel %vm498, %v421, 0.0
        %v515 = vsel %vm499, %v420, 0.0
        %v516 = vsel %vm500, %v419, 0.0
        %v517 = vsel %vm501, %v418, 0.0
        %v518 = vsel %vm502, %v417, 0.0
        %v519 = vsel %vm503, %v416, 0.0
        %v520 = vsel %vm504, %v415, 0.0
        %v521 = vsel %vm505, %v414, 0.0
        %v522 = vsel %vm506, %v413, 0.0
        %v523 = vsel %vm507, %v412, 0.0
        %v524 = vlaneseq
        %v525 = vshrl.u32 %v524, 7
        %v526 = vsub.s32 0, %v525
        %v527 = vrot.slane %v284, %v526
        %v528 = vmul.f32 %v508, %v527
        %v529 = vmul.f32 %v509, %v527
        %v530 = vmul.f32 %v510, %v527
        %v531 = vmul.f32 %v511, %v527
        %v532 = vmul.f32 %v512, %v527
        %v533 = vmul.f32 %v513, %v527
        %v534 = vmul.f32 %v514, %v527
        %v535 = vmul.f32 %v515, %v527
        %v536 = vmul.f32 %v516, %v527
        %v537 = vmul.f32 %v517, %v527
        %v538 = vmul.f32 %v518, %v527
        %v539 = vmul.f32 %v519, %v527
        %v540 = vmul.f32 %v520, %v527
        %v541 = vmul.f32 %v521, %v527
        %v542 = vmul.f32 %v522, %v527
        %v543 = vmul.f32 %v523, %v527
        %v544 = vadd.f32 %v377, %v528
        %v545 = vadd.f32 %v378, %v529
        %v546 = vadd.f32 %v379, %v530
        %v547 = vadd.f32 %v380, %v531
        %v548 = vadd.f32 %v381, %v532
        %v549 = vadd.f32 %v382, %v533
        %v550 = vadd.f32 %v383, %v534
        %v551 = vadd.f32 %v384, %v535
        %v552 = vadd.f32 %v385, %v536
        %v553 = vadd.f32 %v386, %v537
        %v554 = vadd.f32 %v387, %v538
        %v555 = vadd.f32 %v388, %v539
        %v556 = vadd.f32 %v389, %v540
        %v557 = vadd.f32 %v390, %v541
        %v558 = vadd.f32 %v391, %v542
        %v559 = vadd.f32 %v392, %v543
        %v560 = vrot.slane %v341, 1
        %v561 = vrot.slane %v342, 1
        %v562 = vrot.slane %v343, 1
        %v563 = vrot.slane %v344, 1
        %v564 = vrot.slane %v345, 1
        %v565 = vrot.slane %v346, 1
        %v566 = vrot.slane %v347, 1
        %v567 = vrot.slane %v348, 1
        %v568 = vrot.slane %v349, 1
        %v569 = vrot.slane %v350, 1
        %v570 = vrot.slane %v351, 1
        %v571 = vrot.slane %v352, 1
        %v572 = vrot.slane %v353, 1
        %v573 = vrot.slane %v354, 1
        %v574 = vrot.slane %v355, 1
        %v575 = vrot.slane %v356, 1
        %vm576 = vcmp.lt.s32.totalorder %v410, 7
        %v577 = vsel %vm576, %v574, %v575
        %v578 = vsel %vm576, %v573, %v574
        %v579 = vsel %vm576, %v572, %v573
        %v580 = vsel %vm576, %v571, %v572
        %v581 = vsel %vm576, %v570, %v571
        %v582 = vsel %vm576, %v569, %v570
        %v583 = vsel %vm576, %v568, %v569
        %v584 = vsel %vm576, %v567, %v568
        %v585 = vsel %vm576, %v566, %v567
        %v586 = vsel %vm576, %v565, %v566
        %v587 = vsel %vm576, %v564, %v565
        %v588 = vsel %vm576, %v563, %v564
        %v589 = vsel %vm576, %v562, %v563
        %v590 = vsel %vm576, %v561, %v562
        %v591 = vsel %vm576, %v560, %v561
        %v592 = vsel %vm576, %v575, %v560
        %v593 = vsel %vm325, 1, 0
        %v594 = vsel %vm326, 1, 0
        %v595 = vsel %vm327, 1, 0
        %v596 = vsel %vm328, 1, 0
        %v597 = vsel %vm329, 1, 0
        %v598 = vsel %vm330, 1, 0
        %v599 = vsel %vm331, 1, 0
        %v600 = vsel %vm332, 1, 0
        %v601 = vsel %vm333, 1, 0
        %v602 = vsel %vm334, 1, 0
        %v603 = vsel %vm335, 1, 0
        %v604 = vsel %vm336, 1, 0
        %v605 = vsel %vm337, 1, 0
        %v606 = vsel %vm338, 1, 0
        %v607 = vsel %vm339, 1, 0
        %v608 = vsel %vm340, 1, 0
        %609 = vset.pattern.permute.xlu0 0
        %610 = vperm.xlu0 %609, %v593
        %v611 = vpop.permute.xlu0 %610
        %612 = vset.pattern.permute.xlu0 0
        %613 = vperm.xlu0 %612, %v594
        %v614 = vpop.permute.xlu0 %613
        %615 = vset.pattern.permute.xlu0 0
        %616 = vperm.xlu0 %615, %v595
        %v617 = vpop.permute.xlu0 %616
        %618 = vset.pattern.permute.xlu0 0
        %619 = vperm.xlu0 %618, %v596
        %v620 = vpop.permute.xlu0 %619
        %621 = vset.pattern.permute.xlu0 0
        %622 = vperm.xlu0 %621, %v597
        %v623 = vpop.permute.xlu0 %622
        %624 = vset.pattern.permute.xlu0 0
        %625 = vperm.xlu0 %624, %v598
        %v626 = vpop.permute.xlu0 %625
        %627 = vset.pattern.permute.xlu0 0
        %628 = vperm.xlu0 %627, %v599
        %v629 = vpop.permute.xlu0 %628
        %630 = vset.pattern.permute.xlu0 0
        %631 = vperm.xlu0 %630, %v600
        %v632 = vpop.permute.xlu0 %631
        %633 = vset.pattern.permute.xlu0 0
        %634 = vperm.xlu0 %633, %v601
        %v635 = vpop.permute.xlu0 %634
        %636 = vset.pattern.permute.xlu0 0
        %637 = vperm.xlu0 %636, %v602
        %v638 = vpop.permute.xlu0 %637
        %639 = vset.pattern.permute.xlu0 0
        %640 = vperm.xlu0 %639, %v603
        %v641 = vpop.permute.xlu0 %640
        %642 = vset.pattern.permute.xlu0 0
        %643 = vperm.xlu0 %642, %v604
        %v644 = vpop.permute.xlu0 %643
        %645 = vset.pattern.permute.xlu0 0
        %646 = vperm.xlu0 %645, %v605
        %v647 = vpop.permute.xlu0 %646
        %648 = vset.pattern.permute.xlu0 0
        %649 = vperm.xlu0 %648, %v606
        %v650 = vpop.permute.xlu0 %649
        %651 = vset.pattern.permute.xlu0 0
        %652 = vperm.xlu0 %651, %v607
        %v653 = vpop.permute.xlu0 %652
        %654 = vset.pattern.permute.xlu0 0
        %655 = vperm.xlu0 %654, %v608
        %v656 = vpop.permute.xlu0 %655
        %vm657 = vcmp.eq.s32.totalorder %v611, 1
        %vm658 = vcmp.eq.s32.totalorder %v614, 1
        %vm659 = vcmp.eq.s32.totalorder %v617, 1
        %vm660 = vcmp.eq.s32.totalorder %v620, 1
        %vm661 = vcmp.eq.s32.totalorder %v623, 1
        %vm662 = vcmp.eq.s32.totalorder %v626, 1
        %vm663 = vcmp.eq.s32.totalorder %v629, 1
        %vm664 = vcmp.eq.s32.totalorder %v632, 1
        %vm665 = vcmp.eq.s32.totalorder %v635, 1
        %vm666 = vcmp.eq.s32.totalorder %v638, 1
        %vm667 = vcmp.eq.s32.totalorder %v641, 1
        %vm668 = vcmp.eq.s32.totalorder %v644, 1
        %vm669 = vcmp.eq.s32.totalorder %v647, 1
        %vm670 = vcmp.eq.s32.totalorder %v650, 1
        %vm671 = vcmp.eq.s32.totalorder %v653, 1
        %vm672 = vcmp.eq.s32.totalorder %v656, 1
        %v673 = vsel %vm657, %v591, 0.0
        %v674 = vsel %vm658, %v590, 0.0
        %v675 = vsel %vm659, %v589, 0.0
        %v676 = vsel %vm660, %v588, 0.0
        %v677 = vsel %vm661, %v587, 0.0
        %v678 = vsel %vm662, %v586, 0.0
        %v679 = vsel %vm663, %v585, 0.0
        %v680 = vsel %vm664, %v584, 0.0
        %v681 = vsel %vm665, %v583, 0.0
        %v682 = vsel %vm666, %v582, 0.0
        %v683 = vsel %vm667, %v581, 0.0
        %v684 = vsel %vm668, %v580, 0.0
        %v685 = vsel %vm669, %v579, 0.0
        %v686 = vsel %vm670, %v578, 0.0
        %v687 = vsel %vm671, %v577, 0.0
        %v688 = vsel %vm672, %v592, 0.0
        %v689 = vlaneseq
        %v690 = vshrl.u32 %v689, 7
        %v691 = vsub.s32 2, %v690
        %v692 = vrot.slane %v284, %v691
        %v693 = vmul.f32 %v673, %v692
        %v694 = vmul.f32 %v674, %v692
        %v695 = vmul.f32 %v675, %v692
        %v696 = vmul.f32 %v676, %v692
        %v697 = vmul.f32 %v677, %v692
        %v698 = vmul.f32 %v678, %v692
        %v699 = vmul.f32 %v679, %v692
        %v700 = vmul.f32 %v680, %v692
        %v701 = vmul.f32 %v681, %v692
        %v702 = vmul.f32 %v682, %v692
        %v703 = vmul.f32 %v683, %v692
        %v704 = vmul.f32 %v684, %v692
        %v705 = vmul.f32 %v685, %v692
        %v706 = vmul.f32 %v686, %v692
        %v707 = vmul.f32 %v687, %v692
        %v708 = vmul.f32 %v688, %v692
        %v709 = vadd.f32 %v544, %v693
        %v710 = vadd.f32 %v545, %v694
        %v711 = vadd.f32 %v546, %v695
        %v712 = vadd.f32 %v547, %v696
        %v713 = vadd.f32 %v548, %v697
        %v714 = vadd.f32 %v549, %v698
        %v715 = vadd.f32 %v550, %v699
        %v716 = vadd.f32 %v551, %v700
        %v717 = vadd.f32 %v552, %v701
        %v718 = vadd.f32 %v553, %v702
        %v719 = vadd.f32 %v554, %v703
        %v720 = vadd.f32 %v555, %v704
        %v721 = vadd.f32 %v556, %v705
        %v722 = vadd.f32 %v557, %v706
        %v723 = vadd.f32 %v558, %v707
        %v724 = vadd.f32 %v559, %v708
        %v725 = vld [vmem:[#allocation2 + $0x10] sm:$0xff]
        %v726 = vld [vmem:[#allocation2 + $0x18] sm:$0xff]
        %v727 = vld [vmem:[#allocation2 + $0x20] sm:$0xff]
        %v728 = vld [vmem:[#allocation2 + $0x28] sm:$0xff]
        %v729 = vld [vmem:[#allocation2 + $0x30] sm:$0xff]
        %v730 = vld [vmem:[#allocation2 + $0x38] sm:$0xff]
        %v731 = vld [vmem:[#allocation2 + $0x40] sm:$0xff]
        %v732 = vld [vmem:[#allocation2 + $0x48] sm:$0xff]
        %v733 = vld [vmem:[#allocation2 + $0x50] sm:$0xff]
        %v734 = vld [vmem:[#allocation2 + $0x58] sm:$0xff]
        %v735 = vld [vmem:[#allocation2 + $0x60] sm:$0xff]
        %v736 = vld [vmem:[#allocation2 + $0x68] sm:$0xff]
        %v737 = vld [vmem:[#allocation2 + $0x70] sm:$0xff]
        %v738 = vld [vmem:[#allocation2 + $0x78] sm:$0xff]
        %v739 = vld [vmem:[#allocation2 + $0x80] sm:$0xff]
        %v740 = vld [vmem:[#allocation2 + $0x88] sm:$0xff]
        %v741 = vlaneseq
        %v742 = vshrl.u32 %v741, 7
        %v743 = vsub.s32 4, %v742
        %v744 = vrot.slane %v284, %v743
        %v745 = vmul.f32 %v725, %v744
        %v746 = vmul.f32 %v726, %v744
        %v747 = vmul.f32 %v727, %v744
        %v748 = vmul.f32 %v728, %v744
        %v749 = vmul.f32 %v729, %v744
        %v750 = vmul.f32 %v730, %v744
        %v751 = vmul.f32 %v731, %v744
        %v752 = vmul.f32 %v732, %v744
        %v753 = vmul.f32 %v733, %v744
        %v754 = vmul.f32 %v734, %v744
        %v755 = vmul.f32 %v735, %v744
        %v756 = vmul.f32 %v736, %v744
        %v757 = vmul.f32 %v737, %v744
        %v758 = vmul.f32 %v738, %v744
        %v759 = vmul.f32 %v739, %v744
        %v760 = vmul.f32 %v740, %v744
        %v761 = vadd.f32 %v709, %v745
        %v762 = vadd.f32 %v710, %v746
        %v763 = vadd.f32 %v711, %v747
        %v764 = vadd.f32 %v712, %v748
        %v765 = vadd.f32 %v713, %v749
        %v766 = vadd.f32 %v714, %v750
        %v767 = vadd.f32 %v715, %v751
        %v768 = vadd.f32 %v716, %v752
        %v769 = vadd.f32 %v717, %v753
        %v770 = vadd.f32 %v718, %v754
        %v771 = vadd.f32 %v719, %v755
        %v772 = vadd.f32 %v720, %v756
        %v773 = vadd.f32 %v721, %v757
        %v774 = vadd.f32 %v722, %v758
        %v775 = vadd.f32 %v723, %v759
        %v776 = vadd.f32 %v724, %v760
        %v777 = vrot.slane %v725, 7
        %v778 = vrot.slane %v726, 7
        %v779 = vrot.slane %v727, 7
        %v780 = vrot.slane %v728, 7
        %v781 = vrot.slane %v729, 7
        %v782 = vrot.slane %v730, 7
        %v783 = vrot.slane %v731, 7
        %v784 = vrot.slane %v732, 7
        %v785 = vrot.slane %v733, 7
        %v786 = vrot.slane %v734, 7
        %v787 = vrot.slane %v735, 7
        %v788 = vrot.slane %v736, 7
        %v789 = vrot.slane %v737, 7
        %v790 = vrot.slane %v738, 7
        %v791 = vrot.slane %v739, 7
        %v792 = vrot.slane %v740, 7
        %v793 = vsel %vm411, %v791, %v792
        %v794 = vsel %vm411, %v790, %v791
        %v795 = vsel %vm411, %v789, %v790
        %v796 = vsel %vm411, %v788, %v789
        %v797 = vsel %vm411, %v787, %v788
        %v798 = vsel %vm411, %v786, %v787
        %v799 = vsel %vm411, %v785, %v786
        %v800 = vsel %vm411, %v784, %v785
        %v801 = vsel %vm411, %v783, %v784
        %v802 = vsel %vm411, %v782, %v783
        %v803 = vsel %vm411, %v781, %v782
        %v804 = vsel %vm411, %v780, %v781
        %v805 = vsel %vm411, %v779, %v780
        %v806 = vsel %vm411, %v778, %v779
        %v807 = vsel %vm411, %v777, %v778
        %v808 = vsel %vm411, %v792, %v777
        %v809 = vsel %vm492, %v808, 0.0
        %v810 = vsel %vm493, %v807, 0.0
        %v811 = vsel %vm494, %v806, 0.0
        %v812 = vsel %vm495, %v805, 0.0
        %v813 = vsel %vm496, %v804, 0.0
        %v814 = vsel %vm497, %v803, 0.0
        %v815 = vsel %vm498, %v802, 0.0
        %v816 = vsel %vm499, %v801, 0.0
        %v817 = vsel %vm500, %v800, 0.0
        %v818 = vsel %vm501, %v799, 0.0
        %v819 = vsel %vm502, %v798, 0.0
        %v820 = vsel %vm503, %v797, 0.0
        %v821 = vsel %vm504, %v796, 0.0
        %v822 = vsel %vm505, %v795, 0.0
        %v823 = vsel %vm506, %v794, 0.0
        %v824 = vsel %vm507, %v793, 0.0
        %v825 = vlaneseq
        %v826 = vshrl.u32 %v825, 7
        %v827 = vsub.s32 3, %v826
        %v828 = vrot.slane %v284, %v827
        %v829 = vmul.f32 %v809, %v828
        %v830 = vmul.f32 %v810, %v828
        %v831 = vmul.f32 %v811, %v828
        %v832 = vmul.f32 %v812, %v828
        %v833 = vmul.f32 %v813, %v828
        %v834 = vmul.f32 %v814, %v828
        %v835 = vmul.f32 %v815, %v828
        %v836 = vmul.f32 %v816, %v828
        %v837 = vmul.f32 %v817, %v828
        %v838 = vmul.f32 %v818, %v828
        %v839 = vmul.f32 %v819, %v828
        %v840 = vmul.f32 %v820, %v828
        %v841 = vmul.f32 %v821, %v828
        %v842 = vmul.f32 %v822, %v828
        %v843 = vmul.f32 %v823, %v828
        %v844 = vmul.f32 %v824, %v828
        %v845 = vadd.f32 %v761, %v829
        %v846 = vadd.f32 %v762, %v830
        %v847 = vadd.f32 %v763, %v831
        %v848 = vadd.f32 %v764, %v832
        %v849 = vadd.f32 %v765, %v833
        %v850 = vadd.f32 %v766, %v834
        %v851 = vadd.f32 %v767, %v835
        %v852 = vadd.f32 %v768, %v836
        %v853 = vadd.f32 %v769, %v837
        %v854 = vadd.f32 %v770, %v838
        %v855 = vadd.f32 %v771, %v839
        %v856 = vadd.f32 %v772, %v840
        %v857 = vadd.f32 %v773, %v841
        %v858 = vadd.f32 %v774, %v842
        %v859 = vadd.f32 %v775, %v843
        %v860 = vadd.f32 %v776, %v844
        %v861 = vrot.slane %v725, 1
        %v862 = vrot.slane %v726, 1
        %v863 = vrot.slane %v727, 1
        %v864 = vrot.slane %v728, 1
        %v865 = vrot.slane %v729, 1
        %v866 = vrot.slane %v730, 1
        %v867 = vrot.slane %v731, 1
        %v868 = vrot.slane %v732, 1
        %v869 = vrot.slane %v733, 1
        %v870 = vrot.slane %v734, 1
        %v871 = vrot.slane %v735, 1
        %v872 = vrot.slane %v736, 1
        %v873 = vrot.slane %v737, 1
        %v874 = vrot.slane %v738, 1
        %v875 = vrot.slane %v739, 1
        %v876 = vrot.slane %v740, 1
        %v877 = vsel %vm576, %v875, %v876
        %v878 = vsel %vm576, %v874, %v875
        %v879 = vsel %vm576, %v873, %v874
        %v880 = vsel %vm576, %v872, %v873
        %v881 = vsel %vm576, %v871, %v872
        %v882 = vsel %vm576, %v870, %v871
        %v883 = vsel %vm576, %v869, %v870
        %v884 = vsel %vm576, %v868, %v869
        %v885 = vsel %vm576, %v867, %v868
        %v886 = vsel %vm576, %v866, %v867
        %v887 = vsel %vm576, %v865, %v866
        %v888 = vsel %vm576, %v864, %v865
        %v889 = vsel %vm576, %v863, %v864
        %v890 = vsel %vm576, %v862, %v863
        %v891 = vsel %vm576, %v861, %v862
        %v892 = vsel %vm576, %v876, %v861
        %v893 = vsel %vm657, %v891, 0.0
        %v894 = vsel %vm658, %v890, 0.0
        %v895 = vsel %vm659, %v889, 0.0
        %v896 = vsel %vm660, %v888, 0.0
        %v897 = vsel %vm661, %v887, 0.0
        %v898 = vsel %vm662, %v886, 0.0
        %v899 = vsel %vm663, %v885, 0.0
        %v900 = vsel %vm664, %v884, 0.0
        %v901 = vsel %vm665, %v883, 0.0
        %v902 = vsel %vm666, %v882, 0.0
        %v903 = vsel %vm667, %v881, 0.0
        %v904 = vsel %vm668, %v880, 0.0
        %v905 = vsel %vm669, %v879, 0.0
        %v906 = vsel %vm670, %v878, 0.0
        %v907 = vsel %vm671, %v877, 0.0
        %v908 = vsel %vm672, %v892, 0.0
        %v909 = vlaneseq
        %v910 = vshrl.u32 %v909, 7
        %v911 = vsub.s32 5, %v910
        %v912 = vrot.slane %v284, %v911
        %v913 = vmul.f32 %v893, %v912
        %v914 = vmul.f32 %v894, %v912
        %v915 = vmul.f32 %v895, %v912
        %v916 = vmul.f32 %v896, %v912
        %v917 = vmul.f32 %v897, %v912
        %v918 = vmul.f32 %v898, %v912
        %v919 = vmul.f32 %v899, %v912
        %v920 = vmul.f32 %v900, %v912
        %v921 = vmul.f32 %v901, %v912
        %v922 = vmul.f32 %v902, %v912
        %v923 = vmul.f32 %v903, %v912
        %v924 = vmul.f32 %v904, %v912
        %v925 = vmul.f32 %v905, %v912
        %v926 = vmul.f32 %v906, %v912
        %v927 = vmul.f32 %v907, %v912
        %v928 = vmul.f32 %v908, %v912
        %v929 = vadd.f32 %v845, %v913
        %v930 = vadd.f32 %v846, %v914
        %v931 = vadd.f32 %v847, %v915
        %v932 = vadd.f32 %v848, %v916
        %v933 = vadd.f32 %v849, %v917
        %v934 = vadd.f32 %v850, %v918
        %v935 = vadd.f32 %v851, %v919
        %v936 = vadd.f32 %v852, %v920
        %v937 = vadd.f32 %v853, %v921
        %v938 = vadd.f32 %v854, %v922
        %v939 = vadd.f32 %v855, %v923
        %v940 = vadd.f32 %v856, %v924
        %v941 = vadd.f32 %v857, %v925
        %v942 = vadd.f32 %v858, %v926
        %v943 = vadd.f32 %v859, %v927
        %v944 = vadd.f32 %v860, %v928
        %v945 = vld [vmem:[#allocation2 + $0x90] sm:$0xff]
        %v946 = vld [vmem:[#allocation2 + $0x98] sm:$0xff]
        %v947 = vlaneseq
        %v948 = vshrl.u32 %v947, 7
        %v949 = vsub.s32 7, %v948
        %v950 = vrot.slane %v284, %v949
        %v951 = vmul.f32 %v727, %v950
        %v952 = vmul.f32 %v728, %v950
        %v953 = vmul.f32 %v729, %v950
        %v954 = vmul.f32 %v730, %v950
        %v955 = vmul.f32 %v731, %v950
        %v956 = vmul.f32 %v732, %v950
        %v957 = vmul.f32 %v733, %v950
        %v958 = vmul.f32 %v734, %v950
        %v959 = vmul.f32 %v735, %v950
        %v960 = vmul.f32 %v736, %v950
        %v961 = vmul.f32 %v737, %v950
        %v962 = vmul.f32 %v738, %v950
        %v963 = vmul.f32 %v739, %v950
        %v964 = vmul.f32 %v740, %v950
        %v965 = vmul.f32 %v945, %v950
        %v966 = vmul.f32 %v946, %v950
        %v967 = vadd.f32 %v929, %v951
        %v968 = vadd.f32 %v930, %v952
        %v969 = vadd.f32 %v931, %v953
        %v970 = vadd.f32 %v932, %v954
        %v971 = vadd.f32 %v933, %v955
        %v972 = vadd.f32 %v934, %v956
        %v973 = vadd.f32 %v935, %v957
        %v974 = vadd.f32 %v936, %v958
        %v975 = vadd.f32 %v937, %v959
        %v976 = vadd.f32 %v938, %v960
        %v977 = vadd.f32 %v939, %v961
        %v978 = vadd.f32 %v940, %v962
        %v979 = vadd.f32 %v941, %v963
        %v980 = vadd.f32 %v942, %v964
        %v981 = vadd.f32 %v943, %v965
        %v982 = vadd.f32 %v944, %v966
        %v983 = vrot.slane %v945, 7
        %v984 = vrot.slane %v946, 7
        %v985 = vsel %vm411, %v983, %v984
        %v986 = vsel %vm411, %v792, %v983
        %v987 = vsel %vm411, %v984, %v779
        %v988 = vsel %vm492, %v987, 0.0
        %v989 = vsel %vm493, %v805, 0.0
        %v990 = vsel %vm494, %v804, 0.0
        %v991 = vsel %vm495, %v803, 0.0
        %v992 = vsel %vm496, %v802, 0.0
        %v993 = vsel %vm497, %v801, 0.0
        %v994 = vsel %vm498, %v800, 0.0
        %v995 = vsel %vm499, %v799, 0.0
        %v996 = vsel %vm500, %v798, 0.0
        %v997 = vsel %vm501, %v797, 0.0
        %v998 = vsel %vm502, %v796, 0.0
        %v999 = vsel %vm503, %v795, 0.0
        %v1000 = vsel %vm504, %v794, 0.0
        %v1001 = vsel %vm505, %v793, 0.0
        %v1002 = vsel %vm506, %v986, 0.0
        %v1003 = vsel %vm507, %v985, 0.0
        %v1004 = vlaneseq
        %v1005 = vshrl.u32 %v1004, 7
        %v1006 = vsub.s32 6, %v1005
        %v1007 = vrot.slane %v284, %v1006
        %v1008 = vmul.f32 %v988, %v1007
        %v1009 = vmul.f32 %v989, %v1007
        %v1010 = vmul.f32 %v990, %v1007
        %v1011 = vmul.f32 %v991, %v1007
        %v1012 = vmul.f32 %v992, %v1007
        %v1013 = vmul.f32 %v993, %v1007
        %v1014 = vmul.f32 %v994, %v1007
        %v1015 = vmul.f32 %v995, %v1007
        %v1016 = vmul.f32 %v996, %v1007
        %v1017 = vmul.f32 %v997, %v1007
        %v1018 = vmul.f32 %v998, %v1007
        %v1019 = vmul.f32 %v999, %v1007
        %v1020 = vmul.f32 %v1000, %v1007
        %v1021 = vmul.f32 %v1001, %v1007
        %v1022 = vmul.f32 %v1002, %v1007
        %v1023 = vmul.f32 %v1003, %v1007
        %v1024 = vadd.f32 %v967, %v1008
        %v1025 = vadd.f32 %v968, %v1009
        %v1026 = vadd.f32 %v969, %v1010
        %v1027 = vadd.f32 %v970, %v1011
        %v1028 = vadd.f32 %v971, %v1012
        %v1029 = vadd.f32 %v972, %v1013
        %v1030 = vadd.f32 %v973, %v1014
        %v1031 = vadd.f32 %v974, %v1015
        %v1032 = vadd.f32 %v975, %v1016
        %v1033 = vadd.f32 %v976, %v1017
        %v1034 = vadd.f32 %v977, %v1018
        %v1035 = vadd.f32 %v978, %v1019
        %v1036 = vadd.f32 %v979, %v1020
        %v1037 = vadd.f32 %v980, %v1021
        %v1038 = vadd.f32 %v981, %v1022
        %v1039 = vadd.f32 %v982, %v1023
        %v1040 = vrot.slane %v945, 1
        %v1041 = vrot.slane %v946, 1
        %v1042 = vsel %vm576, %v1040, %v1041
        %v1043 = vsel %vm576, %v876, %v1040
        %v1044 = vsel %vm576, %v1041, %v863
        %v1045 = vsel %vm657, %v889, 0.0
        %v1046 = vsel %vm658, %v888, 0.0
        %v1047 = vsel %vm659, %v887, 0.0
        %v1048 = vsel %vm660, %v886, 0.0
        %v1049 = vsel %vm661, %v885, 0.0
        %v1050 = vsel %vm662, %v884, 0.0
        %v1051 = vsel %vm663, %v883, 0.0
        %v1052 = vsel %vm664, %v882, 0.0
        %v1053 = vsel %vm665, %v881, 0.0
        %v1054 = vsel %vm666, %v880, 0.0
        %v1055 = vsel %vm667, %v879, 0.0
        %v1056 = vsel %vm668, %v878, 0.0
        %v1057 = vsel %vm669, %v877, 0.0
        %v1058 = vsel %vm670, %v1043, 0.0
        %v1059 = vsel %vm671, %v1042, 0.0
        %v1060 = vsel %vm672, %v1044, 0.0
        %v1061 = vlaneseq
        %v1062 = vshrl.u32 %v1061, 7
        %v1063 = vsub.s32 0, %v1062
        %v1064 = vrot.slane %v285, %v1063
        %v1065 = vmul.f32 %v1045, %v1064
        %v1066 = vmul.f32 %v1046, %v1064
        %v1067 = vmul.f32 %v1047, %v1064
        %v1068 = vmul.f32 %v1048, %v1064
        %v1069 = vmul.f32 %v1049, %v1064
        %v1070 = vmul.f32 %v1050, %v1064
        %v1071 = vmul.f32 %v1051, %v1064
        %v1072 = vmul.f32 %v1052, %v1064
        %v1073 = vmul.f32 %v1053, %v1064
        %v1074 = vmul.f32 %v1054, %v1064
        %v1075 = vmul.f32 %v1055, %v1064
        %v1076 = vmul.f32 %v1056, %v1064
        %v1077 = vmul.f32 %v1057, %v1064
        %v1078 = vmul.f32 %v1058, %v1064
        %v1079 = vmul.f32 %v1059, %v1064
        %v1080 = vmul.f32 %v1060, %v1064
        %v1081 = vadd.f32 %v1024, %v1065
        %v1082 = vadd.f32 %v1025, %v1066
        %v1083 = vadd.f32 %v1026, %v1067
        %v1084 = vadd.f32 %v1027, %v1068
        %v1085 = vadd.f32 %v1028, %v1069
        %v1086 = vadd.f32 %v1029, %v1070
        %v1087 = vadd.f32 %v1030, %v1071
        %v1088 = vadd.f32 %v1031, %v1072
        %v1089 = vadd.f32 %v1032, %v1073
        %v1090 = vadd.f32 %v1033, %v1074
        %v1091 = vadd.f32 %v1034, %v1075
        %v1092 = vadd.f32 %v1035, %v1076
        %v1093 = vadd.f32 %v1036, %v1077
        %v1094 = vadd.f32 %v1037, %v1078
        %v1095 = vadd.f32 %v1038, %v1079
        %v1096 = vadd.f32 %v1039, %v1080
        %1097 = vst [vmem:[%s215] sm:$0xff] %v1081
        %1098 = vst [vmem:[%s215 + $0x8] sm:$0xff] %v1082
        %1099 = vst [vmem:[%s215 + $0x10] sm:$0xff] %v1083
        %1100 = vst [vmem:[%s215 + $0x18] sm:$0xff] %v1084
        %1101 = vst [vmem:[%s215 + $0x20] sm:$0xff] %v1085
        %1102 = vst [vmem:[%s215 + $0x28] sm:$0xff] %v1086
        %1103 = vst [vmem:[%s215 + $0x30] sm:$0xff] %v1087
        %1104 = vst [vmem:[%s215 + $0x38] sm:$0xff] %v1088
        %1105 = vst [vmem:[%s215 + $0x40] sm:$0xff] %v1089
        %1106 = vst [vmem:[%s215 + $0x48] sm:$0xff] %v1090
        %1107 = vst [vmem:[%s215 + $0x50] sm:$0xff] %v1091
        %1108 = vst [vmem:[%s215 + $0x58] sm:$0xff] %v1092
        %1109 = vst [vmem:[%s215 + $0x60] sm:$0xff] %v1093
        %1110 = vst [vmem:[%s215 + $0x68] sm:$0xff] %v1094
        %1111 = vst [vmem:[%s215 + $0x70] sm:$0xff] %v1095
        %1112 = vst [vmem:[%s215 + $0x78] sm:$0xff] %v1096
        %v1113 = vld [vmem:[#allocation2 + $0x80] sm:$0xff]
        %v1114 = vld [vmem:[#allocation2 + $0x88] sm:$0xff]
        %v1115 = vld [vmem:[#allocation2 + $0x90] sm:$0xff]
        %v1116 = vld [vmem:[#allocation2 + $0x98] sm:$0xff]
        %v1117 = vld [vmem:[#allocation2 + $0xa0] sm:$0xff]
        %v1118 = vld [vmem:[#allocation2 + $0xa8] sm:$0xff]
        %v1119 = vld [vmem:[#allocation2 + $0xb0] sm:$0xff]
        %v1120 = vld [vmem:[#allocation2 + $0xb8] sm:$0xff]
        %v1121 = vld [vmem:[#allocation2 + $0xc0] sm:$0xff]
        %v1122 = vld [vmem:[#allocation2 + $0xc8] sm:$0xff]
        %v1123 = vld [vmem:[#allocation2 + $0xd0] sm:$0xff]
        %v1124 = vld [vmem:[#allocation2 + $0xd8] sm:$0xff]
        %v1125 = vld [vmem:[#allocation2 + $0xe0] sm:$0xff]
        %v1126 = vld [vmem:[#allocation2 + $0xe8] sm:$0xff]
        %v1127 = vld [vmem:[#allocation2 + $0xf0] sm:$0xff]
        %v1128 = vld [vmem:[#allocation2 + $0xf8] sm:$0xff]
        %v1129 = vmul.f32 %v1113, %v360
        %v1130 = vmul.f32 %v1114, %v360
        %v1131 = vmul.f32 %v1115, %v360
        %v1132 = vmul.f32 %v1116, %v360
        %v1133 = vmul.f32 %v1117, %v360
        %v1134 = vmul.f32 %v1118, %v360
        %v1135 = vmul.f32 %v1119, %v360
        %v1136 = vmul.f32 %v1120, %v360
        %v1137 = vmul.f32 %v1121, %v360
        %v1138 = vmul.f32 %v1122, %v360
        %v1139 = vmul.f32 %v1123, %v360
        %v1140 = vmul.f32 %v1124, %v360
        %v1141 = vmul.f32 %v1125, %v360
        %v1142 = vmul.f32 %v1126, %v360
        %v1143 = vmul.f32 %v1127, %v360
        %v1144 = vmul.f32 %v1128, %v360
        %v1145 = vadd.f32 %v291, %v1129
        %v1146 = vadd.f32 %v291, %v1130
        %v1147 = vadd.f32 %v291, %v1131
        %v1148 = vadd.f32 %v291, %v1132
        %v1149 = vadd.f32 %v291, %v1133
        %v1150 = vadd.f32 %v291, %v1134
        %v1151 = vadd.f32 %v291, %v1135
        %v1152 = vadd.f32 %v291, %v1136
        %v1153 = vadd.f32 %v291, %v1137
        %v1154 = vadd.f32 %v291, %v1138
        %v1155 = vadd.f32 %v291, %v1139
        %v1156 = vadd.f32 %v291, %v1140
        %v1157 = vadd.f32 %v291, %v1141
        %v1158 = vadd.f32 %v291, %v1142
        %v1159 = vadd.f32 %v291, %v1143
        %v1160 = vadd.f32 %v291, %v1144
        %v1161 = vrot.slane %v1113, 7
        %v1162 = vrot.slane %v1114, 7
        %v1163 = vrot.slane %v1115, 7
        %v1164 = vrot.slane %v1116, 7
        %v1165 = vrot.slane %v1117, 7
        %v1166 = vrot.slane %v1118, 7
        %v1167 = vrot.slane %v1119, 7
        %v1168 = vrot.slane %v1120, 7
        %v1169 = vrot.slane %v1121, 7
        %v1170 = vrot.slane %v1122, 7
        %v1171 = vrot.slane %v1123, 7
        %v1172 = vrot.slane %v1124, 7
        %v1173 = vrot.slane %v1125, 7
        %v1174 = vrot.slane %v1126, 7
        %v1175 = vrot.slane %v1127, 7
        %v1176 = vrot.slane %v1128, 7
        %v1177 = vsel %vm411, %v1175, %v1176
        %v1178 = vsel %vm411, %v1174, %v1175
        %v1179 = vsel %vm411, %v1173, %v1174
        %v1180 = vsel %vm411, %v1172, %v1173
        %v1181 = vsel %vm411, %v1171, %v1172
        %v1182 = vsel %vm411, %v1170, %v1171
        %v1183 = vsel %vm411, %v1169, %v1170
        %v1184 = vsel %vm411, %v1168, %v1169
        %v1185 = vsel %vm411, %v1167, %v1168
        %v1186 = vsel %vm411, %v1166, %v1167
        %v1187 = vsel %vm411, %v1165, %v1166
        %v1188 = vsel %vm411, %v1164, %v1165
        %v1189 = vsel %vm411, %v1163, %v1164
        %v1190 = vsel %vm411, %v1162, %v1163
        %v1191 = vsel %vm411, %v1161, %v1162
        %v1192 = vsel %vm411, %v1176, %v1161
        %v1193 = vsel %vm492, %v1192, 0.0
        %v1194 = vsel %vm493, %v1191, 0.0
        %v1195 = vsel %vm494, %v1190, 0.0
        %v1196 = vsel %vm495, %v1189, 0.0
        %v1197 = vsel %vm496, %v1188, 0.0
        %v1198 = vsel %vm497, %v1187, 0.0
        %v1199 = vsel %vm498, %v1186, 0.0
        %v1200 = vsel %vm499, %v1185, 0.0
        %v1201 = vsel %vm500, %v1184, 0.0
        %v1202 = vsel %vm501, %v1183, 0.0
        %v1203 = vsel %vm502, %v1182, 0.0
        %v1204 = vsel %vm503, %v1181, 0.0
        %v1205 = vsel %vm504, %v1180, 0.0
        %v1206 = vsel %vm505, %v1179, 0.0
        %v1207 = vsel %vm506, %v1178, 0.0
        %v1208 = vsel %vm507, %v1177, 0.0
        %v1209 = vmul.f32 %v1193, %v527
        %v1210 = vmul.f32 %v1194, %v527
        %v1211 = vmul.f32 %v1195, %v527
        %v1212 = vmul.f32 %v1196, %v527
        %v1213 = vmul.f32 %v1197, %v527
        %v1214 = vmul.f32 %v1198, %v527
        %v1215 = vmul.f32 %v1199, %v527
        %v1216 = vmul.f32 %v1200, %v527
        %v1217 = vmul.f32 %v1201, %v527
        %v1218 = vmul.f32 %v1202, %v527
        %v1219 = vmul.f32 %v1203, %v527
        %v1220 = vmul.f32 %v1204, %v527
        %v1221 = vmul.f32 %v1205, %v527
        %v1222 = vmul.f32 %v1206, %v527
        %v1223 = vmul.f32 %v1207, %v527
        %v1224 = vmul.f32 %v1208, %v527
        %v1225 = vadd.f32 %v1145, %v1209
        %v1226 = vadd.f32 %v1146, %v1210
        %v1227 = vadd.f32 %v1147, %v1211
        %v1228 = vadd.f32 %v1148, %v1212
        %v1229 = vadd.f32 %v1149, %v1213
        %v1230 = vadd.f32 %v1150, %v1214
        %v1231 = vadd.f32 %v1151, %v1215
        %v1232 = vadd.f32 %v1152, %v1216
        %v1233 = vadd.f32 %v1153, %v1217
        %v1234 = vadd.f32 %v1154, %v1218
        %v1235 = vadd.f32 %v1155, %v1219
        %v1236 = vadd.f32 %v1156, %v1220
        %v1237 = vadd.f32 %v1157, %v1221
        %v1238 = vadd.f32 %v1158, %v1222
        %v1239 = vadd.f32 %v1159, %v1223
        %v1240 = vadd.f32 %v1160, %v1224
        %v1241 = vrot.slane %v1113, 1
        %v1242 = vrot.slane %v1114, 1
        %v1243 = vrot.slane %v1115, 1
        %v1244 = vrot.slane %v1116, 1
        %v1245 = vrot.slane %v1117, 1
        %v1246 = vrot.slane %v1118, 1
        %v1247 = vrot.slane %v1119, 1
        %v1248 = vrot.slane %v1120, 1
        %v1249 = vrot.slane %v1121, 1
        %v1250 = vrot.slane %v1122, 1
        %v1251 = vrot.slane %v1123, 1
        %v1252 = vrot.slane %v1124, 1
        %v1253 = vrot.slane %v1125, 1
        %v1254 = vrot.slane %v1126, 1
        %v1255 = vrot.slane %v1127, 1
        %v1256 = vrot.slane %v1128, 1
        %v1257 = vsel %vm576, %v1255, %v1256
        %v1258 = vsel %vm576, %v1254, %v1255
        %v1259 = vsel %vm576, %v1253, %v1254
        %v1260 = vsel %vm576, %v1252, %v1253
        %v1261 = vsel %vm576, %v1251, %v1252
        %v1262 = vsel %vm576, %v1250, %v1251
        %v1263 = vsel %vm576, %v1249, %v1250
        %v1264 = vsel %vm576, %v1248, %v1249
        %v1265 = vsel %vm576, %v1247, %v1248
        %v1266 = vsel %vm576, %v1246, %v1247
        %v1267 = vsel %vm576, %v1245, %v1246
        %v1268 = vsel %vm576, %v1244, %v1245
        %v1269 = vsel %vm576, %v1243, %v1244
        %v1270 = vsel %vm576, %v1242, %v1243
        %v1271 = vsel %vm576, %v1241, %v1242
        %v1272 = vsel %vm576, %v1256, %v1241
        %v1273 = vsel %vm657, %v1271, 0.0
        %v1274 = vsel %vm658, %v1270, 0.0
        %v1275 = vsel %vm659, %v1269, 0.0
        %v1276 = vsel %vm660, %v1268, 0.0
        %v1277 = vsel %vm661, %v1267, 0.0
        %v1278 = vsel %vm662, %v1266, 0.0
        %v1279 = vsel %vm663, %v1265, 0.0
        %v1280 = vsel %vm664, %v1264, 0.0
        %v1281 = vsel %vm665, %v1263, 0.0
        %v1282 = vsel %vm666, %v1262, 0.0
        %v1283 = vsel %vm667, %v1261, 0.0
        %v1284 = vsel %vm668, %v1260, 0.0
        %v1285 = vsel %vm669, %v1259, 0.0
        %v1286 = vsel %vm670, %v1258, 0.0
        %v1287 = vsel %vm671, %v1257, 0.0
        %v1288 = vsel %vm672, %v1272, 0.0
        %v1289 = vmul.f32 %v1273, %v692
        %v1290 = vmul.f32 %v1274, %v692
        %v1291 = vmul.f32 %v1275, %v692
        %v1292 = vmul.f32 %v1276, %v692
        %v1293 = vmul.f32 %v1277, %v692
        %v1294 = vmul.f32 %v1278, %v692
        %v1295 = vmul.f32 %v1279, %v692
        %v1296 = vmul.f32 %v1280, %v692
        %v1297 = vmul.f32 %v1281, %v692
        %v1298 = vmul.f32 %v1282, %v692
        %v1299 = vmul.f32 %v1283, %v692
        %v1300 = vmul.f32 %v1284, %v692
        %v1301 = vmul.f32 %v1285, %v692
        %v1302 = vmul.f32 %v1286, %v692
        %v1303 = vmul.f32 %v1287, %v692
        %v1304 = vmul.f32 %v1288, %v692
        %v1305 = vadd.f32 %v1225, %v1289
        %v1306 = vadd.f32 %v1226, %v1290
        %v1307 = vadd.f32 %v1227, %v1291
        %v1308 = vadd.f32 %v1228, %v1292
        %v1309 = vadd.f32 %v1229, %v1293
        %v1310 = vadd.f32 %v1230, %v1294
        %v1311 = vadd.f32 %v1231, %v1295
        %v1312 = vadd.f32 %v1232, %v1296
        %v1313 = vadd.f32 %v1233, %v1297
        %v1314 = vadd.f32 %v1234, %v1298
        %v1315 = vadd.f32 %v1235, %v1299
        %v1316 = vadd.f32 %v1236, %v1300
        %v1317 = vadd.f32 %v1237, %v1301
        %v1318 = vadd.f32 %v1238, %v1302
        %v1319 = vadd.f32 %v1239, %v1303
        %v1320 = vadd.f32 %v1240, %v1304
        %v1321 = vld [vmem:[#allocation2 + $0x100] sm:$0xff]
        %v1322 = vld [vmem:[#allocation2 + $0x108] sm:$0xff]
        %v1323 = vmul.f32 %v1115, %v744
        %v1324 = vmul.f32 %v1116, %v744
        %v1325 = vmul.f32 %v1117, %v744
        %v1326 = vmul.f32 %v1118, %v744
        %v1327 = vmul.f32 %v1119, %v744
        %v1328 = vmul.f32 %v1120, %v744
        %v1329 = vmul.f32 %v1121, %v744
        %v1330 = vmul.f32 %v1122, %v744
        %v1331 = vmul.f32 %v1123, %v744
        %v1332 = vmul.f32 %v1124, %v744
        %v1333 = vmul.f32 %v1125, %v744
        %v1334 = vmul.f32 %v1126, %v744
        %v1335 = vmul.f32 %v1127, %v744
        %v1336 = vmul.f32 %v1128, %v744
        %v1337 = vmul.f32 %v1321, %v744
        %v1338 = vmul.f32 %v1322, %v744
        %v1339 = vadd.f32 %v1305, %v1323
        %v1340 = vadd.f32 %v1306, %v1324
        %v1341 = vadd.f32 %v1307, %v1325
        %v1342 = vadd.f32 %v1308, %v1326
        %v1343 = vadd.f32 %v1309, %v1327
        %v1344 = vadd.f32 %v1310, %v1328
        %v1345 = vadd.f32 %v1311, %v1329
        %v1346 = vadd.f32 %v1312, %v1330
        %v1347 = vadd.f32 %v1313, %v1331
        %v1348 = vadd.f32 %v1314, %v1332
        %v1349 = vadd.f32 %v1315, %v1333
        %v1350 = vadd.f32 %v1316, %v1334
        %v1351 = vadd.f32 %v1317, %v1335
        %v1352 = vadd.f32 %v1318, %v1336
        %v1353 = vadd.f32 %v1319, %v1337
        %v1354 = vadd.f32 %v1320, %v1338
        %v1355 = vrot.slane %v1321, 7
        %v1356 = vrot.slane %v1322, 7
        %v1357 = vsel %vm411, %v1355, %v1356
        %v1358 = vsel %vm411, %v1176, %v1355
        %v1359 = vsel %vm411, %v1356, %v1163
        %v1360 = vsel %vm492, %v1359, 0.0
        %v1361 = vsel %vm493, %v1189, 0.0
        %v1362 = vsel %vm494, %v1188, 0.0
        %v1363 = vsel %vm495, %v1187, 0.0
        %v1364 = vsel %vm496, %v1186, 0.0
        %v1365 = vsel %vm497, %v1185, 0.0
        %v1366 = vsel %vm498, %v1184, 0.0
        %v1367 = vsel %vm499, %v1183, 0.0
        %v1368 = vsel %vm500, %v1182, 0.0
        %v1369 = vsel %vm501, %v1181, 0.0
        %v1370 = vsel %vm502, %v1180, 0.0
        %v1371 = vsel %vm503, %v1179, 0.0
        %v1372 = vsel %vm504, %v1178, 0.0
        %v1373 = vsel %vm505, %v1177, 0.0
        %v1374 = vsel %vm506, %v1358, 0.0
        %v1375 = vsel %vm507, %v1357, 0.0
        %v1376 = vmul.f32 %v1360, %v828
        %v1377 = vmul.f32 %v1361, %v828
        %v1378 = vmul.f32 %v1362, %v828
        %v1379 = vmul.f32 %v1363, %v828
        %v1380 = vmul.f32 %v1364, %v828
        %v1381 = vmul.f32 %v1365, %v828
        %v1382 = vmul.f32 %v1366, %v828
        %v1383 = vmul.f32 %v1367, %v828
        %v1384 = vmul.f32 %v1368, %v828
        %v1385 = vmul.f32 %v1369, %v828
        %v1386 = vmul.f32 %v1370, %v828
        %v1387 = vmul.f32 %v1371, %v828
        %v1388 = vmul.f32 %v1372, %v828
        %v1389 = vmul.f32 %v1373, %v828
        %v1390 = vmul.f32 %v1374, %v828
        %v1391 = vmul.f32 %v1375, %v828
        %v1392 = vadd.f32 %v1339, %v1376
        %v1393 = vadd.f32 %v1340, %v1377
        %v1394 = vadd.f32 %v1341, %v1378
        %v1395 = vadd.f32 %v1342, %v1379
        %v1396 = vadd.f32 %v1343, %v1380
        %v1397 = vadd.f32 %v1344, %v1381
        %v1398 = vadd.f32 %v1345, %v1382
        %v1399 = vadd.f32 %v1346, %v1383
        %v1400 = vadd.f32 %v1347, %v1384
        %v1401 = vadd.f32 %v1348, %v1385
        %v1402 = vadd.f32 %v1349, %v1386
        %v1403 = vadd.f32 %v1350, %v1387
        %v1404 = vadd.f32 %v1351, %v1388
        %v1405 = vadd.f32 %v1352, %v1389
        %v1406 = vadd.f32 %v1353, %v1390
        %v1407 = vadd.f32 %v1354, %v1391
        %v1408 = vrot.slane %v1321, 1
        %v1409 = vrot.slane %v1322, 1
        %v1410 = vsel %vm576, %v1408, %v1409
        %v1411 = vsel %vm576, %v1256, %v1408
        %v1412 = vsel %vm576, %v1409, %v1243
        %v1413 = vsel %vm657, %v1269, 0.0
        %v1414 = vsel %vm658, %v1268, 0.0
        %v1415 = vsel %vm659, %v1267, 0.0
        %v1416 = vsel %vm660, %v1266, 0.0
        %v1417 = vsel %vm661, %v1265, 0.0
        %v1418 = vsel %vm662, %v1264, 0.0
        %v1419 = vsel %vm663, %v1263, 0.0
        %v1420 = vsel %vm664, %v1262, 0.0
        %v1421 = vsel %vm665, %v1261, 0.0
        %v1422 = vsel %vm666, %v1260, 0.0
        %v1423 = vsel %vm667, %v1259, 0.0
        %v1424 = vsel %vm668, %v1258, 0.0
        %v1425 = vsel %vm669, %v1257, 0.0
        %v1426 = vsel %vm670, %v1411, 0.0
        %v1427 = vsel %vm671, %v1410, 0.0
        %v1428 = vsel %vm672, %v1412, 0.0
        %v1429 = vmul.f32 %v1413, %v912
        %v1430 = vmul.f32 %v1414, %v912
        %v1431 = vmul.f32 %v1415, %v912
        %v1432 = vmul.f32 %v1416, %v912
        %v1433 = vmul.f32 %v1417, %v912
        %v1434 = vmul.f32 %v1418, %v912
        %v1435 = vmul.f32 %v1419, %v912
        %v1436 = vmul.f32 %v1420, %v912
        %v1437 = vmul.f32 %v1421, %v912
        %v1438 = vmul.f32 %v1422, %v912
        %v1439 = vmul.f32 %v1423, %v912
        %v1440 = vmul.f32 %v1424, %v912
        %v1441 = vmul.f32 %v1425, %v912
        %v1442 = vmul.f32 %v1426, %v912
        %v1443 = vmul.f32 %v1427, %v912
        %v1444 = vmul.f32 %v1428, %v912
        %v1445 = vadd.f32 %v1392, %v1429
        %v1446 = vadd.f32 %v1393, %v1430
        %v1447 = vadd.f32 %v1394, %v1431
        %v1448 = vadd.f32 %v1395, %v1432
        %v1449 = vadd.f32 %v1396, %v1433
        %v1450 = vadd.f32 %v1397, %v1434
        %v1451 = vadd.f32 %v1398, %v1435
        %v1452 = vadd.f32 %v1399, %v1436
        %v1453 = vadd.f32 %v1400, %v1437
        %v1454 = vadd.f32 %v1401, %v1438
        %v1455 = vadd.f32 %v1402, %v1439
        %v1456 = vadd.f32 %v1403, %v1440
        %v1457 = vadd.f32 %v1404, %v1441
        %v1458 = vadd.f32 %v1405, %v1442
        %v1459 = vadd.f32 %v1406, %v1443
        %v1460 = vadd.f32 %v1407, %v1444
        %v1461 = vld [vmem:[#allocation2 + $0xa0] sm:$0xff]
        %v1462 = vld [vmem:[#allocation2 + $0xa8] sm:$0xff]
        %v1463 = vld [vmem:[#allocation2 + $0xb0] sm:$0xff]
        %v1464 = vld [vmem:[#allocation2 + $0xb8] sm:$0xff]
        %v1465 = vld [vmem:[#allocation2 + $0xc0] sm:$0xff]
        %v1466 = vld [vmem:[#allocation2 + $0xc8] sm:$0xff]
        %v1467 = vld [vmem:[#allocation2 + $0xd0] sm:$0xff]
        %v1468 = vld [vmem:[#allocation2 + $0xd8] sm:$0xff]
        %v1469 = vld [vmem:[#allocation2 + $0xe0] sm:$0xff]
        %v1470 = vld [vmem:[#allocation2 + $0xe8] sm:$0xff]
        %v1471 = vld [vmem:[#allocation2 + $0xf0] sm:$0xff]
        %v1472 = vld [vmem:[#allocation2 + $0xf8] sm:$0xff]
        %v1473 = vld [vmem:[#allocation2 + $0x100] sm:$0xff]
        %v1474 = vld [vmem:[#allocation2 + $0x108] sm:$0xff]
        %v1475 = vld [vmem:[#allocation2 + $0x110] sm:$0xff]
        %v1476 = vld [vmem:[#allocation2 + $0x118] sm:$0xff]
        %v1477 = vmul.f32 %v1461, %v950
        %v1478 = vmul.f32 %v1462, %v950
        %v1479 = vmul.f32 %v1463, %v950
        %v1480 = vmul.f32 %v1464, %v950
        %v1481 = vmul.f32 %v1465, %v950
        %v1482 = vmul.f32 %v1466, %v950
        %v1483 = vmul.f32 %v1467, %v950
        %v1484 = vmul.f32 %v1468, %v950
        %v1485 = vmul.f32 %v1469, %v950
        %v1486 = vmul.f32 %v1470, %v950
        %v1487 = vmul.f32 %v1471, %v950
        %v1488 = vmul.f32 %v1472, %v950
        %v1489 = vmul.f32 %v1473, %v950
        %v1490 = vmul.f32 %v1474, %v950
        %v1491 = vmul.f32 %v1475, %v950
        %v1492 = vmul.f32 %v1476, %v950
        %v1493 = vadd.f32 %v1445, %v1477
        %v1494 = vadd.f32 %v1446, %v1478
        %v1495 = vadd.f32 %v1447, %v1479
        %v1496 = vadd.f32 %v1448, %v1480
        %v1497 = vadd.f32 %v1449, %v1481
        %v1498 = vadd.f32 %v1450, %v1482
        %v1499 = vadd.f32 %v1451, %v1483
        %v1500 = vadd.f32 %v1452, %v1484
        %v1501 = vadd.f32 %v1453, %v1485
        %v1502 = vadd.f32 %v1454, %v1486
        %v1503 = vadd.f32 %v1455, %v1487
        %v1504 = vadd.f32 %v1456, %v1488
        %v1505 = vadd.f32 %v1457, %v1489
        %v1506 = vadd.f32 %v1458, %v1490
        %v1507 = vadd.f32 %v1459, %v1491
        %v1508 = vadd.f32 %v1460, %v1492
        %v1509 = vrot.slane %v1461, 7
        %v1510 = vrot.slane %v1462, 7
        %v1511 = vrot.slane %v1463, 7
        %v1512 = vrot.slane %v1464, 7
        %v1513 = vrot.slane %v1465, 7
        %v1514 = vrot.slane %v1466, 7
        %v1515 = vrot.slane %v1467, 7
        %v1516 = vrot.slane %v1468, 7
        %v1517 = vrot.slane %v1469, 7
        %v1518 = vrot.slane %v1470, 7
        %v1519 = vrot.slane %v1471, 7
        %v1520 = vrot.slane %v1472, 7
        %v1521 = vrot.slane %v1473, 7
        %v1522 = vrot.slane %v1474, 7
        %v1523 = vrot.slane %v1475, 7
        %v1524 = vrot.slane %v1476, 7
        %v1525 = vsel %vm411, %v1523, %v1524
        %v1526 = vsel %vm411, %v1522, %v1523
        %v1527 = vsel %vm411, %v1521, %v1522
        %v1528 = vsel %vm411, %v1520, %v1521
        %v1529 = vsel %vm411, %v1519, %v1520
        %v1530 = vsel %vm411, %v1518, %v1519
        %v1531 = vsel %vm411, %v1517, %v1518
        %v1532 = vsel %vm411, %v1516, %v1517
        %v1533 = vsel %vm411, %v1515, %v1516
        %v1534 = vsel %vm411, %v1514, %v1515
        %v1535 = vsel %vm411, %v1513, %v1514
        %v1536 = vsel %vm411, %v1512, %v1513
        %v1537 = vsel %vm411, %v1511, %v1512
        %v1538 = vsel %vm411, %v1510, %v1511
        %v1539 = vsel %vm411, %v1509, %v1510
        %v1540 = vsel %vm411, %v1524, %v1509
        %v1541 = vsel %vm492, %v1540, 0.0
        %v1542 = vsel %vm493, %v1539, 0.0
        %v1543 = vsel %vm494, %v1538, 0.0
        %v1544 = vsel %vm495, %v1537, 0.0
        %v1545 = vsel %vm496, %v1536, 0.0
        %v1546 = vsel %vm497, %v1535, 0.0
        %v1547 = vsel %vm498, %v1534, 0.0
        %v1548 = vsel %vm499, %v1533, 0.0
        %v1549 = vsel %vm500, %v1532, 0.0
        %v1550 = vsel %vm501, %v1531, 0.0
        %v1551 = vsel %vm502, %v1530, 0.0
        %v1552 = vsel %vm503, %v1529, 0.0
        %v1553 = vsel %vm504, %v1528, 0.0
        %v1554 = vsel %vm505, %v1527, 0.0
        %v1555 = vsel %vm506, %v1526, 0.0
        %v1556 = vsel %vm507, %v1525, 0.0
        %v1557 = vmul.f32 %v1541, %v1007
        %v1558 = vmul.f32 %v1542, %v1007
        %v1559 = vmul.f32 %v1543, %v1007
        %v1560 = vmul.f32 %v1544, %v1007
        %v1561 = vmul.f32 %v1545, %v1007
        %v1562 = vmul.f32 %v1546, %v1007
        %v1563 = vmul.f32 %v1547, %v1007
        %v1564 = vmul.f32 %v1548, %v1007
        %v1565 = vmul.f32 %v1549, %v1007
        %v1566 = vmul.f32 %v1550, %v1007
        %v1567 = vmul.f32 %v1551, %v1007
        %v1568 = vmul.f32 %v1552, %v1007
        %v1569 = vmul.f32 %v1553, %v1007
        %v1570 = vmul.f32 %v1554, %v1007
        %v1571 = vmul.f32 %v1555, %v1007
        %v1572 = vmul.f32 %v1556, %v1007
        %v1573 = vadd.f32 %v1493, %v1557
        %v1574 = vadd.f32 %v1494, %v1558
        %v1575 = vadd.f32 %v1495, %v1559
        %v1576 = vadd.f32 %v1496, %v1560
        %v1577 = vadd.f32 %v1497, %v1561
        %v1578 = vadd.f32 %v1498, %v1562
        %v1579 = vadd.f32 %v1499, %v1563
        %v1580 = vadd.f32 %v1500, %v1564
        %v1581 = vadd.f32 %v1501, %v1565
        %v1582 = vadd.f32 %v1502, %v1566
        %v1583 = vadd.f32 %v1503, %v1567
        %v1584 = vadd.f32 %v1504, %v1568
        %v1585 = vadd.f32 %v1505, %v1569
        %v1586 = vadd.f32 %v1506, %v1570
        %v1587 = vadd.f32 %v1507, %v1571
        %v1588 = vadd.f32 %v1508, %v1572
        %v1589 = vrot.slane %v1461, 1
        %v1590 = vrot.slane %v1462, 1
        %v1591 = vrot.slane %v1463, 1
        %v1592 = vrot.slane %v1464, 1
        %v1593 = vrot.slane %v1465, 1
        %v1594 = vrot.slane %v1466, 1
        %v1595 = vrot.slane %v1467, 1
        %v1596 = vrot.slane %v1468, 1
        %v1597 = vrot.slane %v1469, 1
        %v1598 = vrot.slane %v1470, 1
        %v1599 = vrot.slane %v1471, 1
        %v1600 = vrot.slane %v1472, 1
        %v1601 = vrot.slane %v1473, 1
        %v1602 = vrot.slane %v1474, 1
        %v1603 = vrot.slane %v1475, 1
        %v1604 = vrot.slane %v1476, 1
        %v1605 = vsel %vm576, %v1603, %v1604
        %v1606 = vsel %vm576, %v1602, %v1603
        %v1607 = vsel %vm576, %v1601, %v1602
        %v1608 = vsel %vm576, %v1600, %v1601
        %v1609 = vsel %vm576, %v1599, %v1600
        %v1610 = vsel %vm576, %v1598, %v1599
        %v1611 = vsel %vm576, %v1597, %v1598
        %v1612 = vsel %vm576, %v1596, %v1597
        %v1613 = vsel %vm576, %v1595, %v1596
        %v1614 = vsel %vm576, %v1594, %v1595
        %v1615 = vsel %vm576, %v1593, %v1594
        %v1616 = vsel %vm576, %v1592, %v1593
        %v1617 = vsel %vm576, %v1591, %v1592
        %v1618 = vsel %vm576, %v1590, %v1591
        %v1619 = vsel %vm576, %v1589, %v1590
        %v1620 = vsel %vm576, %v1604, %v1589
        %v1621 = vsel %vm657, %v1619, 0.0
        %v1622 = vsel %vm658, %v1618, 0.0
        %v1623 = vsel %vm659, %v1617, 0.0
        %v1624 = vsel %vm660, %v1616, 0.0
        %v1625 = vsel %vm661, %v1615, 0.0
        %v1626 = vsel %vm662, %v1614, 0.0
        %v1627 = vsel %vm663, %v1613, 0.0
        %v1628 = vsel %vm664, %v1612, 0.0
        %v1629 = vsel %vm665, %v1611, 0.0
        %v1630 = vsel %vm666, %v1610, 0.0
        %v1631 = vsel %vm667, %v1609, 0.0
        %v1632 = vsel %vm668, %v1608, 0.0
        %v1633 = vsel %vm669, %v1607, 0.0
        %v1634 = vsel %vm670, %v1606, 0.0
        %v1635 = vsel %vm671, %v1605, 0.0
        %v1636 = vsel %vm672, %v1620, 0.0
        %v1637 = vmul.f32 %v1621, %v1064
        %v1638 = vmul.f32 %v1622, %v1064
        %v1639 = vmul.f32 %v1623, %v1064
        %v1640 = vmul.f32 %v1624, %v1064
        %v1641 = vmul.f32 %v1625, %v1064
        %v1642 = vmul.f32 %v1626, %v1064
        %v1643 = vmul.f32 %v1627, %v1064
        %v1644 = vmul.f32 %v1628, %v1064
        %v1645 = vmul.f32 %v1629, %v1064
        %v1646 = vmul.f32 %v1630, %v1064
        %v1647 = vmul.f32 %v1631, %v1064
        %v1648 = vmul.f32 %v1632, %v1064
        %v1649 = vmul.f32 %v1633, %v1064
        %v1650 = vmul.f32 %v1634, %v1064
        %v1651 = vmul.f32 %v1635, %v1064
        %v1652 = vmul.f32 %v1636, %v1064
        %v1653 = vadd.f32 %v1573, %v1637
        %v1654 = vadd.f32 %v1574, %v1638
        %v1655 = vadd.f32 %v1575, %v1639
        %v1656 = vadd.f32 %v1576, %v1640
        %v1657 = vadd.f32 %v1577, %v1641
        %v1658 = vadd.f32 %v1578, %v1642
        %v1659 = vadd.f32 %v1579, %v1643
        %v1660 = vadd.f32 %v1580, %v1644
        %v1661 = vadd.f32 %v1581, %v1645
        %v1662 = vadd.f32 %v1582, %v1646
        %v1663 = vadd.f32 %v1583, %v1647
        %v1664 = vadd.f32 %v1584, %v1648
        %v1665 = vadd.f32 %v1585, %v1649
        %v1666 = vadd.f32 %v1586, %v1650
        %v1667 = vadd.f32 %v1587, %v1651
        %v1668 = vadd.f32 %v1588, %v1652
        %1669 = vst [vmem:[%s215 + $0x80] sm:$0xff] %v1653
        %1670 = vst [vmem:[%s215 + $0x88] sm:$0xff] %v1654
        %1671 = vst [vmem:[%s215 + $0x90] sm:$0xff] %v1655
        %1672 = vst [vmem:[%s215 + $0x98] sm:$0xff] %v1656
        %1673 = vst [vmem:[%s215 + $0xa0] sm:$0xff] %v1657
        %1674 = vst [vmem:[%s215 + $0xa8] sm:$0xff] %v1658
        %1675 = vst [vmem:[%s215 + $0xb0] sm:$0xff] %v1659
        %1676 = vst [vmem:[%s215 + $0xb8] sm:$0xff] %v1660
        %1677 = vst [vmem:[%s215 + $0xc0] sm:$0xff] %v1661
        %1678 = vst [vmem:[%s215 + $0xc8] sm:$0xff] %v1662
        %1679 = vst [vmem:[%s215 + $0xd0] sm:$0xff] %v1663
        %1680 = vst [vmem:[%s215 + $0xd8] sm:$0xff] %v1664
        %1681 = vst [vmem:[%s215 + $0xe0] sm:$0xff] %v1665
        %1682 = vst [vmem:[%s215 + $0xe8] sm:$0xff] %v1666
        %1683 = vst [vmem:[%s215 + $0xf0] sm:$0xff] %v1667
        %1684 = vst [vmem:[%s215 + $0xf8] sm:$0xff] %v1668
        %s1685 = sand.u32 %s118, 1
        %s1686 = scalar_lea.sflag [#allocation5], %s1685
        %s1687 = sand.u32 %s118, 1
        %s1688 = smul.addr %s1687, 256
        %s1689 = scalar_lea.vmem [#allocation6], %s1688
        // Predicated region
        $region41: #{tpu_custom_call.1} parent=35 // pred_check
          %p1690 = pneg %p128
        $region42: #{tpu_custom_call.1} parent=35 // pred_check_branch
          %1692 = sbr.rel (%p1690) target = $region44
        $region43: #{tpu_custom_call.1} parent=35 // pred_region
          %s1694 = ssub.s32 4096, 4096
          %1695 = vsyncadd %s1686, %s1694
          %s1696 = smul.addr %s21, 32
          %s1697 = smul.addr %s1696, 128
          %s1698 = scalar_lea.hbm %s4, %s1697
          %s1699 = sshll.u32 %s1689, 4
          %s1700 = int_to_ptr.vmem [resolvable:$true] %s1699
          %1705 = dma.vmem_to_hbm [thread:$0]  %s1700, 4096, %s1698, %s1686, 128, 128, 8
        $region44: #{tpu_custom_call.1} parent=35 // pred_fallthru
          _
      $region36: #{tpu_custom_call.1} parent=5 // pred_fallthru
        _
      %p1706 = scmp.le.s32.totalorder 2, %s16
      // Predicated region
      $region45: #{tpu_custom_call.1} parent=5 // pred_check
        %p1707 = pneg %p1706
      $region46: #{tpu_custom_call.1} parent=5 // pred_check_branch
        %1709 = sbr.rel (%p1707) target = $region48
      $region47: #{tpu_custom_call.1} parent=5 // pred_region
        %s1710 = ssub.s32 %s16, 2
        // Predicated region
        $region49: #{tpu_custom_call.1} parent=47 // pred_check
          %p1711 = pneg %p134
        $region50: #{tpu_custom_call.1} parent=47 // pred_check_branch
          %1713 = sbr.rel (%p1711) target = $region52
        $region51: #{tpu_custom_call.1} parent=47 // pred_region
          %s1714 = sand.u32 %s119, 1
          %s1715 = scalar_lea.sflag [#allocation5], %s1714
          %s1716 = sand.u32 %s119, 1
          %s1717 = smul.addr %s1716, 256
          %s1718 = scalar_lea.vmem [#allocation6], %s1717
          %1719 = dma.done %s1715, 4096
        $region52: #{tpu_custom_call.1} parent=47 // pred_fallthru
          _
      $region48: #{tpu_custom_call.1} parent=5 // pred_fallthru
        _
    $region6: #{tpu_custom_call.1} parent=1 // loop_footer
      %s20 = sadd.s32 1, %s16
    $region7: #{tpu_custom_call.1} parent=1 // loop_footer_branch
      %15 = sbr.rel target = $region3
    $region8: #{tpu_custom_call.1} parent=1 // loop_exit
      _
    %1720 = vsyncpa [#allocation4], 1
    %s1721 = scalar_lea.sflag [#allocation4], 1
    %1722 = vsyncpa %s1721, 1
    %1723 = vsyncpa [#allocation5], 1
    %s1724 = scalar_lea.sflag [#allocation5], 1
    %1725 = vsyncpa %s1724, 1

</llo_original>
